<compile_context>
chip_gen: v7x
topology: tpu7x:2x2x1
jax: 0.10.0
libtpu: 0.0.40
codegen_flags: <defaults>
</compile_context>

<pallas_src>
import functools

import jax
import jax.numpy as jnp
from jax import lax
from jax.experimental import pallas as pl
from jax.experimental.pallas import tpu as pltpu


# --------------------------- Fused MHA forward kernel --------------------------------
def _mha_fused_kernel(*refs, n_head, scale, has_mask):
    if has_mask:
        (xq_ref, xk_ref, xv_ref, wq_ref, wk_ref, wv_ref,
         wo_ref, bo_ref, mask_ref, o_ref, ctx_ref) = refs
    else:
        (xq_ref, xk_ref, xv_ref, wq_ref, wk_ref, wv_ref,
         wo_ref, bo_ref, o_ref, ctx_ref) = refs
        mask_ref = None

    f32 = jnp.float32
    # Contract the last dim of both operands: x[M,Din] . W[Dout,Din] == x @ W.T,
    # fed to the MXU with no relayout of the PyTorch-layout weight.
    tb = (((1,), (1,)), ((), ()))

    Bb, Sq, D = xq_ref.shape
    Sk = xk_ref.shape[1]
    dh = D // n_head

    # Fold the batch block into the matmul M dimension (one fat projection each).
    xq = xq_ref[...].reshape(Bb * Sq, D)
    xk = xk_ref[...].reshape(Bb * Sk, D)
    xv = xv_ref[...].reshape(Bb * Sk, D)

    q = lax.dot_general(xq, wq_ref[...], tb, preferred_element_type=f32)  # [Bb*Sq, D]
    k = lax.dot_general(xk, wk_ref[...], tb, preferred_element_type=f32)  # [Bb*Sk, D]
    v = lax.dot_general(xv, wv_ref[...], tb, preferred_element_type=f32)  # [Bb*Sk, D]

    if has_mask:
        # 0/1 mask -> additive -1e9 mask; scale + broadcast hoisted out of the loop.
        neg_mask = jnp.broadcast_to(
            (mask_ref[...] * (-1e9))[None], (Bb, Sq, Sk)).astype(f32)

    # Per-head Euclid-distance attention, batched over the Bb batch elements.
    # Each head's context lands in its lane slice of the ctx slab so the output
    # projection below is one full-K matmul.
    for h in range(n_head):               # static, small n_head -> unrolled
        sl = slice(h * dh, (h + 1) * dh)
        qh = q[:, sl].reshape(Bb, Sq, dh)
        kh = k[:, sl].reshape(Bb, Sk, dh)
        vh = v[:, sl].reshape(Bb, Sk, dh)

        # torch.cdist(q, k, p=2): sqrt(max(|q|^2 + |k|^2 - 2 q.k, 0))
        qn = jnp.sum(qh * qh, axis=-1, keepdims=True)             # [Bb, Sq, 1]
        kn = jnp.sum(kh * kh, axis=-1)                            # [Bb, Sk]
        qk = jnp.einsum("bqd,bkd->bqk", qh, kh,
                        preferred_element_type=f32)               # [Bb, Sq, Sk]
        d2 = jnp.maximum(qn + kn[:, None, :] - 2.0 * qk, 0.0)
        dist = jnp.sqrt(d2) * scale
        # Exact form kept for parity with the PyTorch module (attn = 1/(dist+1e-9)).
        attn = 1.0 / (dist + 1e-9)
        if has_mask:
            attn = attn + neg_mask

        # softmax over the key axis (exact reciprocal for spec parity)
        attn = attn - jnp.max(attn, axis=-1, keepdims=True)
        p = jnp.exp(attn)
        p = p / jnp.sum(p, axis=-1, keepdims=True)
        # TODO(synk): attention dropout omitted (eval/inference mode).

        oh = jnp.einsum("bqk,bkd->bqd", p.astype(vh.dtype), vh,
                        preferred_element_type=f32)               # [Bb, Sq, dh]
        ctx_ref[:, sl] = oh.reshape(Bb * Sq, dh)

    # Single full-K output projection + bias over the whole [Bb*Sq, D] slab.
    out = lax.dot_general(ctx_ref[...], wo_ref[...], tb,
                          preferred_element_type=f32) + bo_ref[...]
    o_ref[...] = out.reshape(Bb, Sq, D).astype(o_ref.dtype)


# --------------------------------- Python wrapper ------------------------------------
def multi_head_attention(query, key, value, params, n_head, attn_mask=None):
    B, Sq, D = query.shape
    Sk = key.shape[1]
    dh = D // n_head
    scale = float(dh) ** (-0.5)

    # Batch blocking: fold several batch elements per grid step (fat MXU M,
    # fewer per-step overheads), but keep >= 2 parallel grid steps when B
    # allows so both v7x TensorCores are used.  v5e/v6e have 1 TC; the extra
    # step there costs ~0.35 us and is negligible.
    if B >= 2 and B % 2 == 0:
        n_blocks = 2
    else:
        n_blocks = B
    Bb = B // n_blocks

    bo2 = params["bo"].reshape(1, D)
    inputs = [query, key, value,
              params["wq"], params["wk"], params["wv"], params["wo"], bo2]
    in_specs = [
        pl.BlockSpec((Bb, Sq, D), lambda b: (b, 0, 0)),
        pl.BlockSpec((Bb, Sk, D), lambda b: (b, 0, 0)),
        pl.BlockSpec((Bb, Sk, D), lambda b: (b, 0, 0)),
        pl.BlockSpec((D, D), lambda b: (0, 0)),   # weights: constant index -> resident
        pl.BlockSpec((D, D), lambda b: (0, 0)),
        pl.BlockSpec((D, D), lambda b: (0, 0)),
        pl.BlockSpec((D, D), lambda b: (0, 0)),
        pl.BlockSpec((1, D), lambda b: (0, 0)),
    ]

    has_mask = attn_mask is not None
    if has_mask:
        inputs.append(attn_mask.astype(jnp.float32))   # raw 0/1 mask; scaled in-kernel
        in_specs.append(pl.BlockSpec((Sq, Sk), lambda b: (0, 0)))

    kern = functools.partial(_mha_fused_kernel, n_head=n_head, scale=scale,
                             has_mask=has_mask)
    return pl.pallas_call(
        kern,
        out_shape=jax.ShapeDtypeStruct((B, Sq, D), query.dtype),
        grid=(n_blocks,),
        in_specs=in_specs,
        out_specs=pl.BlockSpec((Bb, Sq, D), lambda b: (b, 0, 0)),
        scratch_shapes=[pltpu.VMEM((Bb * Sq, D), jnp.float32)],
        compiler_params=pltpu.CompilerParams(dimension_semantics=("parallel",)),
    )(*inputs)


# --------------------------------- Pure-JAX reference --------------------------------
def reference_forward(query, key, value, params, n_head, attn_mask=None):
    B, Sq, D = query.shape
    Sk = key.shape[1]
    dh = D // n_head
    scale = float(dh) ** (-0.5)
    q = query @ params["wq"].T
    k = key @ params["wk"].T
    v = value @ params["wv"].T
    q4 = q.reshape(B, Sq, n_head, dh).transpose(0, 2, 1, 3)
    k4 = k.reshape(B, Sk, n_head, dh).transpose(0, 2, 1, 3)
    v4 = v.reshape(B, Sk, n_head, dh).transpose(0, 2, 1, 3)
    qn = jnp.sum(q4 * q4, axis=-1, keepdims=True)
    kn = jnp.sum(k4 * k4, axis=-1, keepdims=True)
    d2 = jnp.maximum(qn + jnp.swapaxes(kn, -1, -2)
                     - 2.0 * jnp.einsum("bhqd,bhkd->bhqk", q4, k4), 0.0)
    dist = jnp.sqrt(d2) * scale
    attn = 1.0 / (dist + 1e-9)
    if attn_mask is not None:
        attn = attn + attn_mask[None, None].astype(jnp.float32) * (-1e9)
    attn = jax.nn.softmax(attn, axis=-1)
    x = jnp.einsum("bhqk,bhkd->bhqd", attn, v4)
    x = x.transpose(0, 2, 1, 3).reshape(B, Sq, D)
    return x @ params["wo"].T + params["bo"]


# --------------------------------------- Main ----------------------------------------
if __name__ == "__main__":
    B, S, D, H = 4, 8, 32, 4    # B=4 -> 2 grid steps x 2 batch elems per block

    key0 = jax.random.PRNGKey(0)
    ks = jax.random.split(key0, 8)
    init = lambda k, shape: (jax.random.normal(k, shape, jnp.float32) * 0.1)

    params = {
        "wq": init(ks[0], (D, D)),   # qkv_bias=False -> no q/k/v biases
        "wk": init(ks[1], (D, D)),
        "wv": init(ks[2], (D, D)),
        "wo": init(ks[3], (D, D)),
        "bo": init(ks[4], (D,)),
    }

    query = jax.random.normal(ks[5], (B, S, D), jnp.float32)
    key_in = jax.random.normal(ks[6], (B, S, D), jnp.float32)
    value = jax.random.normal(ks[7], (B, S, D), jnp.float32)

    # No-mask path
    out = multi_head_attention(query, key_in, value, params, H, attn_mask=None)
    out = jax.block_until_ready(out)
    ref = reference_forward(query, key_in, value, params, H, attn_mask=None)
    assert out.shape == (B, S, D)
    assert jnp.all(jnp.isfinite(out))
    assert jnp.allclose(out, ref, atol=1e-3, rtol=1e-3)

    # Masked path (causal-style 0/1 mask, 1 = masked)
    mask = jnp.triu(jnp.ones((S, S), jnp.float32), k=1)
    out_m = multi_head_attention(query, key_in, value, params, H, attn_mask=mask)
    out_m = jax.block_until_ready(out_m)
    ref_m = reference_forward(query, key_in, value, params, H, attn_mask=mask)
    assert jnp.all(jnp.isfinite(out_m))
    assert jnp.allclose(out_m, ref_m, atol=1e-3, rtol=1e-3)

    print("KERNEL_OK")
</pallas_src>

<mosaic_0001>
module attributes {stable_mosaic.version = 11 : i64} {
  func.func @_mha_fused_kernel(%arg0: i32, %arg1: memref<2x8x32xf32, #tpu.memory_space<vmem>>, %arg2: memref<2x8x32xf32, #tpu.memory_space<vmem>>, %arg3: memref<2x8x32xf32, #tpu.memory_space<vmem>>, %arg4: memref<32x32xf32, #tpu.memory_space<vmem>>, %arg5: memref<32x32xf32, #tpu.memory_space<vmem>>, %arg6: memref<32x32xf32, #tpu.memory_space<vmem>>, %arg7: memref<32x32xf32, #tpu.memory_space<vmem>>, %arg8: memref<1x32xf32, #tpu.memory_space<vmem>>, %arg9: memref<2x8x32xf32, #tpu.memory_space<vmem>>, %arg10: memref<16x32xf32, #tpu.memory_space<vmem>>) attributes {dimension_semantics = [#tpu.dimension_semantics<parallel>], iteration_bounds = array<i64: 2>, scalar_prefetch = 0 : i64, scratch_operands = 1 : i64, tpu.core_type = #tpu.core_type<tc>, window_params = [{transform_indices = @transform_0, window_bounds = array<i64: 2, 8, 32>}, {transform_indices = @transform_1, window_bounds = array<i64: 2, 8, 32>}, {transform_indices = @transform_2, window_bounds = array<i64: 2, 8, 32>}, {pipeline_mode = #tpu.pipeline_mode<synchronous>, transform_indices = @transform_3, window_bounds = array<i64: 32, 32>}, {pipeline_mode = #tpu.pipeline_mode<synchronous>, transform_indices = @transform_4, window_bounds = array<i64: 32, 32>}, {pipeline_mode = #tpu.pipeline_mode<synchronous>, transform_indices = @transform_5, window_bounds = array<i64: 32, 32>}, {pipeline_mode = #tpu.pipeline_mode<synchronous>, transform_indices = @transform_6, window_bounds = array<i64: 32, 32>}, {pipeline_mode = #tpu.pipeline_mode<synchronous>, transform_indices = @transform_7, window_bounds = array<i64: 1, 32>}, {transform_indices = @transform_8, window_bounds = array<i64: 2, 8, 32>}]} {
    %c0 = arith.constant 0 : index
    %c0_0 = arith.constant 0 : index
    %c0_1 = arith.constant 0 : index
    %0 = vector.load %arg1[%c0, %c0_0, %c0_1] : memref<2x8x32xf32, #tpu.memory_space<vmem>>, vector<2x8x32xf32>
    %1 = vector.shape_cast %0 : vector<2x8x32xf32> to vector<16x32xf32>
    %c0_2 = arith.constant 0 : index
    %c0_3 = arith.constant 0 : index
    %c0_4 = arith.constant 0 : index
    %2 = vector.load %arg2[%c0_2, %c0_3, %c0_4] : memref<2x8x32xf32, #tpu.memory_space<vmem>>, vector<2x8x32xf32>
    %3 = vector.shape_cast %2 : vector<2x8x32xf32> to vector<16x32xf32>
    %c0_5 = arith.constant 0 : index
    %c0_6 = arith.constant 0 : index
    %c0_7 = arith.constant 0 : index
    %4 = vector.load %arg3[%c0_5, %c0_6, %c0_7] : memref<2x8x32xf32, #tpu.memory_space<vmem>>, vector<2x8x32xf32>
    %5 = vector.shape_cast %4 : vector<2x8x32xf32> to vector<16x32xf32>
    %c0_8 = arith.constant 0 : index
    %c0_9 = arith.constant 0 : index
    %6 = vector.load %arg4[%c0_8, %c0_9] : memref<32x32xf32, #tpu.memory_space<vmem>>, vector<32x32xf32>
    %cst = arith.constant dense<0.000000e+00> : vector<16x32xf32>
    %7 = tpu.matmul %1, %6, %cst {dimension_numbers = #tpu.dot_dimension_numbers<[1], [1], [0], [0], [0, 0, 1, 0], [], []>} : vector<16x32xf32>, vector<32x32xf32>, vector<16x32xf32> -> vector<16x32xf32>
    %c0_10 = arith.constant 0 : index
    %c0_11 = arith.constant 0 : index
    %8 = vector.load %arg5[%c0_10, %c0_11] : memref<32x32xf32, #tpu.memory_space<vmem>>, vector<32x32xf32>
    %cst_12 = arith.constant dense<0.000000e+00> : vector<16x32xf32>
    %9 = tpu.matmul %3, %8, %cst_12 {dimension_numbers = #tpu.dot_dimension_numbers<[1], [1], [0], [0], [0, 0, 1, 0], [], []>} : vector<16x32xf32>, vector<32x32xf32>, vector<16x32xf32> -> vector<16x32xf32>
    %c0_13 = arith.constant 0 : index
    %c0_14 = arith.constant 0 : index
    %10 = vector.load %arg6[%c0_13, %c0_14] : memref<32x32xf32, #tpu.memory_space<vmem>>, vector<32x32xf32>
    %cst_15 = arith.constant dense<0.000000e+00> : vector<16x32xf32>
    %11 = tpu.matmul %5, %10, %cst_15 {dimension_numbers = #tpu.dot_dimension_numbers<[1], [1], [0], [0], [0, 0, 1, 0], [], []>} : vector<16x32xf32>, vector<32x32xf32>, vector<16x32xf32> -> vector<16x32xf32>
    %12 = vector.extract_strided_slice %7 {offsets = [0, 0], sizes = [16, 8], strides = [1, 1]} : vector<16x32xf32> to vector<16x8xf32>
    %13 = vector.shape_cast %12 : vector<16x8xf32> to vector<2x8x8xf32>
    %14 = vector.extract_strided_slice %9 {offsets = [0, 0], sizes = [16, 8], strides = [1, 1]} : vector<16x32xf32> to vector<16x8xf32>
    %15 = vector.shape_cast %14 : vector<16x8xf32> to vector<2x8x8xf32>
    %16 = vector.extract_strided_slice %11 {offsets = [0, 0], sizes = [16, 8], strides = [1, 1]} : vector<16x32xf32> to vector<16x8xf32>
    %17 = vector.shape_cast %16 : vector<16x8xf32> to vector<2x8x8xf32>
    %18 = arith.mulf %13, %13 : vector<2x8x8xf32>
    %cst_16 = arith.constant dense<0.000000e+00> : vector<2x8xf32>
    %19 = vector.multi_reduction <add>, %18, %cst_16 [2] : vector<2x8x8xf32> to vector<2x8xf32>
    %20 = vector.shape_cast %19 : vector<2x8xf32> to vector<2x8x1xf32>
    %21 = arith.mulf %15, %15 : vector<2x8x8xf32>
    %cst_17 = arith.constant dense<0.000000e+00> : vector<2x8xf32>
    %22 = vector.multi_reduction <add>, %21, %cst_17 [2] : vector<2x8x8xf32> to vector<2x8xf32>
    "tpu.trace_start"() <{level = 10 : i32, message = "bqd,bkd->bqk"}> : () -> ()
    %cst_18 = arith.constant dense<0.000000e+00> : vector<2x8x8xf32>
    %23 = tpu.matmul %13, %15, %cst_18 {dimension_numbers = #tpu.dot_dimension_numbers<[2], [2], [1], [1], [0, 0, 0, 1, 1, 1], [0], [0]>} : vector<2x8x8xf32>, vector<2x8x8xf32>, vector<2x8x8xf32> -> vector<2x8x8xf32>
    "tpu.trace_stop"() : () -> ()
    %24 = vector.shape_cast %22 : vector<2x8xf32> to vector<2x1x8xf32>
    %25 = vector.broadcast %20 : vector<2x8x1xf32> to vector<2x8x8xf32>
    %26 = vector.broadcast %24 : vector<2x1x8xf32> to vector<2x8x8xf32>
    %27 = arith.addf %25, %26 : vector<2x8x8xf32>
    %cst_19 = arith.constant 2.000000e+00 : f32
    %28 = vector.broadcast %cst_19 : f32 to vector<2x8x8xf32>
    %29 = arith.mulf %28, %23 : vector<2x8x8xf32>
    %30 = arith.subf %27, %29 : vector<2x8x8xf32>
    %cst_20 = arith.constant 0.000000e+00 : f32
    %31 = vector.broadcast %cst_20 : f32 to vector<2x8x8xf32>
    %32 = arith.maximumf %30, %31 : vector<2x8x8xf32>
    %33 = math.sqrt %32 : vector<2x8x8xf32>
    %cst_21 = arith.constant 0.353553385 : f32
    %34 = vector.broadcast %cst_21 : f32 to vector<2x8x8xf32>
    %35 = arith.mulf %33, %34 : vector<2x8x8xf32>
    %cst_22 = arith.constant 9.99999971E-10 : f32
    %36 = vector.broadcast %cst_22 : f32 to vector<2x8x8xf32>
    %37 = arith.addf %35, %36 : vector<2x8x8xf32>
    %cst_23 = arith.constant 1.000000e+00 : f32
    %38 = vector.broadcast %cst_23 : f32 to vector<2x8x8xf32>
    %39 = arith.divf %38, %37 : vector<2x8x8xf32>
    %cst_24 = arith.constant dense<0xFF800000> : vector<2x8xf32>
    %40 = vector.multi_reduction <maximumf>, %39, %cst_24 [2] : vector<2x8x8xf32> to vector<2x8xf32>
    %41 = vector.shape_cast %40 : vector<2x8xf32> to vector<2x8x1xf32>
    %42 = vector.broadcast %41 : vector<2x8x1xf32> to vector<2x8x8xf32>
    %43 = arith.subf %39, %42 : vector<2x8x8xf32>
    %44 = math.exp %43 : vector<2x8x8xf32>
    %cst_25 = arith.constant dense<0.000000e+00> : vector<2x8xf32>
    %45 = vector.multi_reduction <add>, %44, %cst_25 [2] : vector<2x8x8xf32> to vector<2x8xf32>
    %46 = vector.shape_cast %45 : vector<2x8xf32> to vector<2x8x1xf32>
    %47 = vector.broadcast %46 : vector<2x8x1xf32> to vector<2x8x8xf32>
    %48 = arith.divf %44, %47 : vector<2x8x8xf32>
    "tpu.trace_start"() <{level = 10 : i32, message = "bqk,bkd->bqd"}> : () -> ()
    %cst_26 = arith.constant dense<0.000000e+00> : vector<2x8x8xf32>
    %49 = tpu.matmul %48, %17, %cst_26 {dimension_numbers = #tpu.dot_dimension_numbers<[2], [1], [1], [2], [0, 0, 0, 1, 1, 2], [0], [0]>} : vector<2x8x8xf32>, vector<2x8x8xf32>, vector<2x8x8xf32> -> vector<2x8x8xf32>
    "tpu.trace_stop"() : () -> ()
    %50 = vector.shape_cast %49 : vector<2x8x8xf32> to vector<16x8xf32>
    %c0_27 = arith.constant 0 : index
    %c0_28 = arith.constant 0 : index
    %51 = vector.load %arg10[%c0_27, %c0_28] : memref<16x32xf32, #tpu.memory_space<vmem>>, vector<16x8xf32>
    tpu.vector_store %arg10[%c0_27, %c0_28], %50 {strides = array<i32>} : memref<16x32xf32, #tpu.memory_space<vmem>>, vector<16x8xf32>,
    %52 = vector.extract_strided_slice %7 {offsets = [0, 8], sizes = [16, 8], strides = [1, 1]} : vector<16x32xf32> to vector<16x8xf32>
    %53 = vector.shape_cast %52 : vector<16x8xf32> to vector<2x8x8xf32>
    %54 = vector.extract_strided_slice %9 {offsets = [0, 8], sizes = [16, 8], strides = [1, 1]} : vector<16x32xf32> to vector<16x8xf32>
    %55 = vector.shape_cast %54 : vector<16x8xf32> to vector<2x8x8xf32>
    %56 = vector.extract_strided_slice %11 {offsets = [0, 8], sizes = [16, 8], strides = [1, 1]} : vector<16x32xf32> to vector<16x8xf32>
    %57 = vector.shape_cast %56 : vector<16x8xf32> to vector<2x8x8xf32>
    %58 = arith.mulf %53, %53 : vector<2x8x8xf32>
    %cst_29 = arith.constant dense<0.000000e+00> : vector<2x8xf32>
    %59 = vector.multi_reduction <add>, %58, %cst_29 [2] : vector<2x8x8xf32> to vector<2x8xf32>
    %60 = vector.shape_cast %59 : vector<2x8xf32> to vector<2x8x1xf32>
    %61 = arith.mulf %55, %55 : vector<2x8x8xf32>
    %cst_30 = arith.constant dense<0.000000e+00> : vector<2x8xf32>
    %62 = vector.multi_reduction <add>, %61, %cst_30 [2] : vector<2x8x8xf32> to vector<2x8xf32>
    "tpu.trace_start"() <{level = 10 : i32, message = "bqd,bkd->bqk"}> : () -> ()
    %cst_31 = arith.constant dense<0.000000e+00> : vector<2x8x8xf32>
    %63 = tpu.matmul %53, %55, %cst_31 {dimension_numbers = #tpu.dot_dimension_numbers<[2], [2], [1], [1], [0, 0, 0, 1, 1, 1], [0], [0]>} : vector<2x8x8xf32>, vector<2x8x8xf32>, vector<2x8x8xf32> -> vector<2x8x8xf32>
    "tpu.trace_stop"() : () -> ()
    %64 = vector.shape_cast %62 : vector<2x8xf32> to vector<2x1x8xf32>
    %65 = vector.broadcast %60 : vector<2x8x1xf32> to vector<2x8x8xf32>
    %66 = vector.broadcast %64 : vector<2x1x8xf32> to vector<2x8x8xf32>
    %67 = arith.addf %65, %66 : vector<2x8x8xf32>
    %cst_32 = arith.constant 2.000000e+00 : f32
    %68 = vector.broadcast %cst_32 : f32 to vector<2x8x8xf32>
    %69 = arith.mulf %68, %63 : vector<2x8x8xf32>
    %70 = arith.subf %67, %69 : vector<2x8x8xf32>
    %cst_33 = arith.constant 0.000000e+00 : f32
    %71 = vector.broadcast %cst_33 : f32 to vector<2x8x8xf32>
    %72 = arith.maximumf %70, %71 : vector<2x8x8xf32>
    %73 = math.sqrt %72 : vector<2x8x8xf32>
    %cst_34 = arith.constant 0.353553385 : f32
    %74 = vector.broadcast %cst_34 : f32 to vector<2x8x8xf32>
    %75 = arith.mulf %73, %74 : vector<2x8x8xf32>
    %cst_35 = arith.constant 9.99999971E-10 : f32
    %76 = vector.broadcast %cst_35 : f32 to vector<2x8x8xf32>
    %77 = arith.addf %75, %76 : vector<2x8x8xf32>
    %cst_36 = arith.constant 1.000000e+00 : f32
    %78 = vector.broadcast %cst_36 : f32 to vector<2x8x8xf32>
    %79 = arith.divf %78, %77 : vector<2x8x8xf32>
    %cst_37 = arith.constant dense<0xFF800000> : vector<2x8xf32>
    %80 = vector.multi_reduction <maximumf>, %79, %cst_37 [2] : vector<2x8x8xf32> to vector<2x8xf32>
    %81 = vector.shape_cast %80 : vector<2x8xf32> to vector<2x8x1xf32>
    %82 = vector.broadcast %81 : vector<2x8x1xf32> to vector<2x8x8xf32>
    %83 = arith.subf %79, %82 : vector<2x8x8xf32>
    %84 = math.exp %83 : vector<2x8x8xf32>
    %cst_38 = arith.constant dense<0.000000e+00> : vector<2x8xf32>
    %85 = vector.multi_reduction <add>, %84, %cst_38 [2] : vector<2x8x8xf32> to vector<2x8xf32>
    %86 = vector.shape_cast %85 : vector<2x8xf32> to vector<2x8x1xf32>
    %87 = vector.broadcast %86 : vector<2x8x1xf32> to vector<2x8x8xf32>
    %88 = arith.divf %84, %87 : vector<2x8x8xf32>
    "tpu.trace_start"() <{level = 10 : i32, message = "bqk,bkd->bqd"}> : () -> ()
    %cst_39 = arith.constant dense<0.000000e+00> : vector<2x8x8xf32>
    %89 = tpu.matmul %88, %57, %cst_39 {dimension_numbers = #tpu.dot_dimension_numbers<[2], [1], [1], [2], [0, 0, 0, 1, 1, 2], [0], [0]>} : vector<2x8x8xf32>, vector<2x8x8xf32>, vector<2x8x8xf32> -> vector<2x8x8xf32>
    "tpu.trace_stop"() : () -> ()
    %90 = vector.shape_cast %89 : vector<2x8x8xf32> to vector<16x8xf32>
    %c0_40 = arith.constant 0 : index
    %c8 = arith.constant 8 : index
    %91 = vector.load %arg10[%c0_40, %c8] : memref<16x32xf32, #tpu.memory_space<vmem>>, vector<16x8xf32>
    tpu.vector_store %arg10[%c0_40, %c8], %90 {strides = array<i32>} : memref<16x32xf32, #tpu.memory_space<vmem>>, vector<16x8xf32>,
    %92 = vector.extract_strided_slice %7 {offsets = [0, 16], sizes = [16, 8], strides = [1, 1]} : vector<16x32xf32> to vector<16x8xf32>
    %93 = vector.shape_cast %92 : vector<16x8xf32> to vector<2x8x8xf32>
    %94 = vector.extract_strided_slice %9 {offsets = [0, 16], sizes = [16, 8], strides = [1, 1]} : vector<16x32xf32> to vector<16x8xf32>
    %95 = vector.shape_cast %94 : vector<16x8xf32> to vector<2x8x8xf32>
    %96 = vector.extract_strided_slice %11 {offsets = [0, 16], sizes = [16, 8], strides = [1, 1]} : vector<16x32xf32> to vector<16x8xf32>
    %97 = vector.shape_cast %96 : vector<16x8xf32> to vector<2x8x8xf32>
    %98 = arith.mulf %93, %93 : vector<2x8x8xf32>
    %cst_41 = arith.constant dense<0.000000e+00> : vector<2x8xf32>
    %99 = vector.multi_reduction <add>, %98, %cst_41 [2] : vector<2x8x8xf32> to vector<2x8xf32>
    %100 = vector.shape_cast %99 : vector<2x8xf32> to vector<2x8x1xf32>
    %101 = arith.mulf %95, %95 : vector<2x8x8xf32>
    %cst_42 = arith.constant dense<0.000000e+00> : vector<2x8xf32>
    %102 = vector.multi_reduction <add>, %101, %cst_42 [2] : vector<2x8x8xf32> to vector<2x8xf32>
    "tpu.trace_start"() <{level = 10 : i32, message = "bqd,bkd->bqk"}> : () -> ()
    %cst_43 = arith.constant dense<0.000000e+00> : vector<2x8x8xf32>
    %103 = tpu.matmul %93, %95, %cst_43 {dimension_numbers = #tpu.dot_dimension_numbers<[2], [2], [1], [1], [0, 0, 0, 1, 1, 1], [0], [0]>} : vector<2x8x8xf32>, vector<2x8x8xf32>, vector<2x8x8xf32> -> vector<2x8x8xf32>
    "tpu.trace_stop"() : () -> ()
    %104 = vector.shape_cast %102 : vector<2x8xf32> to vector<2x1x8xf32>
    %105 = vector.broadcast %100 : vector<2x8x1xf32> to vector<2x8x8xf32>
    %106 = vector.broadcast %104 : vector<2x1x8xf32> to vector<2x8x8xf32>
    %107 = arith.addf %105, %106 : vector<2x8x8xf32>
    %cst_44 = arith.constant 2.000000e+00 : f32
    %108 = vector.broadcast %cst_44 : f32 to vector<2x8x8xf32>
    %109 = arith.mulf %108, %103 : vector<2x8x8xf32>
    %110 = arith.subf %107, %109 : vector<2x8x8xf32>
    %cst_45 = arith.constant 0.000000e+00 : f32
    %111 = vector.broadcast %cst_45 : f32 to vector<2x8x8xf32>
    %112 = arith.maximumf %110, %111 : vector<2x8x8xf32>
    %113 = math.sqrt %112 : vector<2x8x8xf32>
    %cst_46 = arith.constant 0.353553385 : f32
    %114 = vector.broadcast %cst_46 : f32 to vector<2x8x8xf32>
    %115 = arith.mulf %113, %114 : vector<2x8x8xf32>
    %cst_47 = arith.constant 9.99999971E-10 : f32
    %116 = vector.broadcast %cst_47 : f32 to vector<2x8x8xf32>
    %117 = arith.addf %115, %116 : vector<2x8x8xf32>
    %cst_48 = arith.constant 1.000000e+00 : f32
    %118 = vector.broadcast %cst_48 : f32 to vector<2x8x8xf32>
    %119 = arith.divf %118, %117 : vector<2x8x8xf32>
    %cst_49 = arith.constant dense<0xFF800000> : vector<2x8xf32>
    %120 = vector.multi_reduction <maximumf>, %119, %cst_49 [2] : vector<2x8x8xf32> to vector<2x8xf32>
    %121 = vector.shape_cast %120 : vector<2x8xf32> to vector<2x8x1xf32>
    %122 = vector.broadcast %121 : vector<2x8x1xf32> to vector<2x8x8xf32>
    %123 = arith.subf %119, %122 : vector<2x8x8xf32>
    %124 = math.exp %123 : vector<2x8x8xf32>
    %cst_50 = arith.constant dense<0.000000e+00> : vector<2x8xf32>
    %125 = vector.multi_reduction <add>, %124, %cst_50 [2] : vector<2x8x8xf32> to vector<2x8xf32>
    %126 = vector.shape_cast %125 : vector<2x8xf32> to vector<2x8x1xf32>
    %127 = vector.broadcast %126 : vector<2x8x1xf32> to vector<2x8x8xf32>
    %128 = arith.divf %124, %127 : vector<2x8x8xf32>
    "tpu.trace_start"() <{level = 10 : i32, message = "bqk,bkd->bqd"}> : () -> ()
    %cst_51 = arith.constant dense<0.000000e+00> : vector<2x8x8xf32>
    %129 = tpu.matmul %128, %97, %cst_51 {dimension_numbers = #tpu.dot_dimension_numbers<[2], [1], [1], [2], [0, 0, 0, 1, 1, 2], [0], [0]>} : vector<2x8x8xf32>, vector<2x8x8xf32>, vector<2x8x8xf32> -> vector<2x8x8xf32>
    "tpu.trace_stop"() : () -> ()
    %130 = vector.shape_cast %129 : vector<2x8x8xf32> to vector<16x8xf32>
    %c0_52 = arith.constant 0 : index
    %c16 = arith.constant 16 : index
    %131 = vector.load %arg10[%c0_52, %c16] : memref<16x32xf32, #tpu.memory_space<vmem>>, vector<16x8xf32>
    tpu.vector_store %arg10[%c0_52, %c16], %130 {strides = array<i32>} : memref<16x32xf32, #tpu.memory_space<vmem>>, vector<16x8xf32>,
    %132 = vector.extract_strided_slice %7 {offsets = [0, 24], sizes = [16, 8], strides = [1, 1]} : vector<16x32xf32> to vector<16x8xf32>
    %133 = vector.shape_cast %132 : vector<16x8xf32> to vector<2x8x8xf32>
    %134 = vector.extract_strided_slice %9 {offsets = [0, 24], sizes = [16, 8], strides = [1, 1]} : vector<16x32xf32> to vector<16x8xf32>
    %135 = vector.shape_cast %134 : vector<16x8xf32> to vector<2x8x8xf32>
    %136 = vector.extract_strided_slice %11 {offsets = [0, 24], sizes = [16, 8], strides = [1, 1]} : vector<16x32xf32> to vector<16x8xf32>
    %137 = vector.shape_cast %136 : vector<16x8xf32> to vector<2x8x8xf32>
    %138 = arith.mulf %133, %133 : vector<2x8x8xf32>
    %cst_53 = arith.constant dense<0.000000e+00> : vector<2x8xf32>
    %139 = vector.multi_reduction <add>, %138, %cst_53 [2] : vector<2x8x8xf32> to vector<2x8xf32>
    %140 = vector.shape_cast %139 : vector<2x8xf32> to vector<2x8x1xf32>
    %141 = arith.mulf %135, %135 : vector<2x8x8xf32>
    %cst_54 = arith.constant dense<0.000000e+00> : vector<2x8xf32>
    %142 = vector.multi_reduction <add>, %141, %cst_54 [2] : vector<2x8x8xf32> to vector<2x8xf32>
    "tpu.trace_start"() <{level = 10 : i32, message = "bqd,bkd->bqk"}> : () -> ()
    %cst_55 = arith.constant dense<0.000000e+00> : vector<2x8x8xf32>
    %143 = tpu.matmul %133, %135, %cst_55 {dimension_numbers = #tpu.dot_dimension_numbers<[2], [2], [1], [1], [0, 0, 0, 1, 1, 1], [0], [0]>} : vector<2x8x8xf32>, vector<2x8x8xf32>, vector<2x8x8xf32> -> vector<2x8x8xf32>
    "tpu.trace_stop"() : () -> ()
    %144 = vector.shape_cast %142 : vector<2x8xf32> to vector<2x1x8xf32>
    %145 = vector.broadcast %140 : vector<2x8x1xf32> to vector<2x8x8xf32>
    %146 = vector.broadcast %144 : vector<2x1x8xf32> to vector<2x8x8xf32>
    %147 = arith.addf %145, %146 : vector<2x8x8xf32>
    %cst_56 = arith.constant 2.000000e+00 : f32
    %148 = vector.broadcast %cst_56 : f32 to vector<2x8x8xf32>
    %149 = arith.mulf %148, %143 : vector<2x8x8xf32>
    %150 = arith.subf %147, %149 : vector<2x8x8xf32>
    %cst_57 = arith.constant 0.000000e+00 : f32
    %151 = vector.broadcast %cst_57 : f32 to vector<2x8x8xf32>
    %152 = arith.maximumf %150, %151 : vector<2x8x8xf32>
    %153 = math.sqrt %152 : vector<2x8x8xf32>
    %cst_58 = arith.constant 0.353553385 : f32
    %154 = vector.broadcast %cst_58 : f32 to vector<2x8x8xf32>
    %155 = arith.mulf %153, %154 : vector<2x8x8xf32>
    %cst_59 = arith.constant 9.99999971E-10 : f32
    %156 = vector.broadcast %cst_59 : f32 to vector<2x8x8xf32>
    %157 = arith.addf %155, %156 : vector<2x8x8xf32>
    %cst_60 = arith.constant 1.000000e+00 : f32
    %158 = vector.broadcast %cst_60 : f32 to vector<2x8x8xf32>
    %159 = arith.divf %158, %157 : vector<2x8x8xf32>
    %cst_61 = arith.constant dense<0xFF800000> : vector<2x8xf32>
    %160 = vector.multi_reduction <maximumf>, %159, %cst_61 [2] : vector<2x8x8xf32> to vector<2x8xf32>
    %161 = vector.shape_cast %160 : vector<2x8xf32> to vector<2x8x1xf32>
    %162 = vector.broadcast %161 : vector<2x8x1xf32> to vector<2x8x8xf32>
    %163 = arith.subf %159, %162 : vector<2x8x8xf32>
    %164 = math.exp %163 : vector<2x8x8xf32>
    %cst_62 = arith.constant dense<0.000000e+00> : vector<2x8xf32>
    %165 = vector.multi_reduction <add>, %164, %cst_62 [2] : vector<2x8x8xf32> to vector<2x8xf32>
    %166 = vector.shape_cast %165 : vector<2x8xf32> to vector<2x8x1xf32>
    %167 = vector.broadcast %166 : vector<2x8x1xf32> to vector<2x8x8xf32>
    %168 = arith.divf %164, %167 : vector<2x8x8xf32>
    "tpu.trace_start"() <{level = 10 : i32, message = "bqk,bkd->bqd"}> : () -> ()
    %cst_63 = arith.constant dense<0.000000e+00> : vector<2x8x8xf32>
    %169 = tpu.matmul %168, %137, %cst_63 {dimension_numbers = #tpu.dot_dimension_numbers<[2], [1], [1], [2], [0, 0, 0, 1, 1, 2], [0], [0]>} : vector<2x8x8xf32>, vector<2x8x8xf32>, vector<2x8x8xf32> -> vector<2x8x8xf32>
    "tpu.trace_stop"() : () -> ()
    %170 = vector.shape_cast %169 : vector<2x8x8xf32> to vector<16x8xf32>
    %c0_64 = arith.constant 0 : index
    %c24 = arith.constant 24 : index
    %171 = vector.load %arg10[%c0_64, %c24] : memref<16x32xf32, #tpu.memory_space<vmem>>, vector<16x8xf32>
    tpu.vector_store %arg10[%c0_64, %c24], %170 {strides = array<i32>} : memref<16x32xf32, #tpu.memory_space<vmem>>, vector<16x8xf32>,
    %c0_65 = arith.constant 0 : index
    %c0_66 = arith.constant 0 : index
    %172 = vector.load %arg10[%c0_65, %c0_66] : memref<16x32xf32, #tpu.memory_space<vmem>>, vector<16x32xf32>
    %c0_67 = arith.constant 0 : index
    %c0_68 = arith.constant 0 : index
    %173 = vector.load %arg7[%c0_67, %c0_68] : memref<32x32xf32, #tpu.memory_space<vmem>>, vector<32x32xf32>
    %cst_69 = arith.constant dense<0.000000e+00> : vector<16x32xf32>
    %174 = tpu.matmul %172, %173, %cst_69 {dimension_numbers = #tpu.dot_dimension_numbers<[1], [1], [0], [0], [0, 0, 1, 0], [], []>} : vector<16x32xf32>, vector<32x32xf32>, vector<16x32xf32> -> vector<16x32xf32>
    %c0_70 = arith.constant 0 : index
    %c0_71 = arith.constant 0 : index
    %175 = vector.load %arg8[%c0_70, %c0_71] : memref<1x32xf32, #tpu.memory_space<vmem>>, vector<1x32xf32>
    %176 = vector.broadcast %175 : vector<1x32xf32> to vector<16x32xf32>
    %177 = arith.addf %174, %176 : vector<16x32xf32>
    %178 = vector.shape_cast %177 : vector<16x32xf32> to vector<2x8x32xf32>
    %c0_72 = arith.constant 0 : index
    %c0_73 = arith.constant 0 : index
    %c0_74 = arith.constant 0 : index
    %179 = vector.load %arg9[%c0_72, %c0_73, %c0_74] : memref<2x8x32xf32, #tpu.memory_space<vmem>>, vector<2x8x32xf32>
    tpu.vector_store %arg9[%c0_72, %c0_73, %c0_74], %178 {strides = array<i32>} : memref<2x8x32xf32, #tpu.memory_space<vmem>>, vector<2x8x32xf32>,
    return
  }
  func.func @transform_0(%arg0: i32) -> (i32, i32, i32) {
    %c0_i32 = arith.constant 0 : i32
    %c0_i32_0 = arith.constant 0 : i32
    %c0_i32_1 = arith.constant 0 : i32
    return %arg0, %c0_i32, %c0_i32_0 : i32, i32, i32
  }
  func.func @transform_1(%arg0: i32) -> (i32, i32, i32) {
    %c0_i32 = arith.constant 0 : i32
    %c0_i32_0 = arith.constant 0 : i32
    %c0_i32_1 = arith.constant 0 : i32
    return %arg0, %c0_i32, %c0_i32_0 : i32, i32, i32
  }
  func.func @transform_2(%arg0: i32) -> (i32, i32, i32) {
    %c0_i32 = arith.constant 0 : i32
    %c0_i32_0 = arith.constant 0 : i32
    %c0_i32_1 = arith.constant 0 : i32
    return %arg0, %c0_i32, %c0_i32_0 : i32, i32, i32
  }
  func.func @transform_3(%arg0: i32) -> (i32, i32) {
    %c0_i32 = arith.constant 0 : i32
    %c0_i32_0 = arith.constant 0 : i32
    %c0_i32_1 = arith.constant 0 : i32
    return %c0_i32, %c0_i32_0 : i32, i32
  }
  func.func @transform_4(%arg0: i32) -> (i32, i32) {
    %c0_i32 = arith.constant 0 : i32
    %c0_i32_0 = arith.constant 0 : i32
    %c0_i32_1 = arith.constant 0 : i32
    return %c0_i32, %c0_i32_0 : i32, i32
  }
  func.func @transform_5(%arg0: i32) -> (i32, i32) {
    %c0_i32 = arith.constant 0 : i32
    %c0_i32_0 = arith.constant 0 : i32
    %c0_i32_1 = arith.constant 0 : i32
    return %c0_i32, %c0_i32_0 : i32, i32
  }
  func.func @transform_6(%arg0: i32) -> (i32, i32) {
    %c0_i32 = arith.constant 0 : i32
    %c0_i32_0 = arith.constant 0 : i32
    %c0_i32_1 = arith.constant 0 : i32
    return %c0_i32, %c0_i32_0 : i32, i32
  }
  func.func @transform_7(%arg0: i32) -> (i32, i32) {
    %c0_i32 = arith.constant 0 : i32
    %c0_i32_0 = arith.constant 0 : i32
    %c0_i32_1 = arith.constant 0 : i32
    return %c0_i32, %c0_i32_0 : i32, i32
  }
  func.func @transform_8(%arg0: i32) -> (i32, i32, i32) {
    %c0_i32 = arith.constant 0 : i32
    %c0_i32_0 = arith.constant 0 : i32
    %c0_i32_1 = arith.constant 0 : i32
    return %arg0, %c0_i32, %c0_i32_0 : i32, i32, i32
  }
}

</mosaic_0001>

<llo_original>
// kernel: tpu_custom_call.1
$region0: #{tpu_custom_call.1}
  #allocation0 [shape = 'u32[]', space=smem, size = 0x4, offset = 0x4, fixed_abs, tag = 'smem constant byte address 0x4 - core index']
  #allocation1 [shape = 'u32[144,128]{1,0:T(1,128)}', space=vmem, size = 0x12000, scoped, tag = 'internal scratch']
  #allocation2 [shape = 'f32[16,32]{1,0:T(8,128)}', space=vmem, size = 0x2000, scoped, tag = 'scratch operand']
  %s0 = inlined_call_operand.hbm [shape: f32[4,8,32], index: 0, kind: input, shape index: {}]
  %s1 = inlined_call_operand.hbm [shape: f32[4,8,32], index: 1, kind: input, shape index: {}]
  %s2 = inlined_call_operand.hbm [shape: f32[4,8,32], index: 2, kind: input, shape index: {}]
  %s3 = inlined_call_operand.hbm [shape: f32[32,32], index: 3, kind: input, shape index: {}]
  %s4 = inlined_call_operand.hbm [shape: f32[32,32], index: 4, kind: input, shape index: {}]
  %s5 = inlined_call_operand.hbm [shape: f32[32,32], index: 5, kind: input, shape index: {}]
  %s6 = inlined_call_operand.hbm [shape: f32[32,32], index: 6, kind: input, shape index: {}]
  %s7 = inlined_call_operand.vmem [shape: f32[1,32], index: 7, kind: input, shape index: {}]
  %s8 = inlined_call_operand.hbm [shape: f32[4,8,32], index: 8, kind: output, shape index: {}]
  %s9 = sld [smem:[#allocation0]]
  $region93: #{tpu_custom_call.1} parent=0
    _
  %s11 = ssub.s32 1, %s9
  %s12 = scalar_select 0, %s11, %s9
  $region1: #{tpu_custom_call.1} parent=0
    #allocation3 [shape = 'u8[16384]{0}', space=vmem, size = 0x4000, scoped, tag = 'input window, operand 0']
    #allocation4 [shape = 's32[2]{0}', space=sflag, size = 0x8, scoped, tag = 'scoped memory for tpu_custom_call.1']
    #allocation5 [shape = 's32[2]{0}', space=sflag, size = 0x8, scoped, tag = 'scoped memory for tpu_custom_call.1']
    #allocation6 [shape = 'u8[16384]{0}', space=vmem, size = 0x4000, scoped, tag = 'input window, operand 1']
    #allocation7 [shape = 's32[2]{0}', space=sflag, size = 0x8, scoped, tag = 'scoped memory for tpu_custom_call.1']
    #allocation8 [shape = 'u8[16384]{0}', space=vmem, size = 0x4000, scoped, tag = 'input window, operand 2']
    #allocation9 [shape = 'u8[16384]{0}', space=vmem, size = 0x4000, scoped, tag = 'input window, operand 3, single buffered']
    #allocation10 [shape = 's32[1]{0}', space=sflag, size = 0x4, scoped, tag = 'scoped memory for tpu_custom_call.1']
    #allocation11 [shape = 'u8[16384]{0}', space=vmem, size = 0x4000, scoped, tag = 'input window, operand 4, single buffered']
    #allocation12 [shape = 'u8[16384]{0}', space=vmem, size = 0x4000, scoped, tag = 'input window, operand 5, single buffered']
    #allocation13 [shape = 's32[1]{0}', space=sflag, size = 0x4, scoped, tag = 'scoped memory for tpu_custom_call.1']
    #allocation14 [shape = 'u8[16384]{0}', space=vmem, size = 0x4000, scoped, tag = 'input window, operand 6, single buffered']
    #allocation15 [shape = 'u8[16384]{0}', space=vmem, size = 0x4000, scoped, tag = 'output window, operand 0']
    %13 = vsyncpa [#allocation4], 0
    %s14 = scalar_lea.sflag [#allocation4], 1
    %15 = vsyncpa %s14, 0
    %16 = vsyncpa [#allocation7], 0
    %s17 = scalar_lea.sflag [#allocation7], 1
    %18 = vsyncpa %s17, 0
    %19 = vsyncpa [#allocation10], 0
    %20 = vsyncpa [#allocation13], 0
    %21 = vsyncpa [#allocation5], 0
    %s22 = scalar_lea.sflag [#allocation5], 1
    %23 = vsyncpa %s22, 0
    loop: start=0, step=1, limit=4
    $region2: #{tpu_custom_call.1} parent=1 // loop_pre_header
      _
    $region3: #{tpu_custom_call.1} parent=1 // loop_header
      %s25 = sphi 0, %s29
      %p26 = scmp.ge.s32.totalorder %s25, 4
      %s35 = sphi 0, %s37
      %s38 = sphi 0, %s35
      %s39 = sphi 0, %s38
      %s55 = sphi 0, %s39
      %s61 = sphi 0, %s63
      %s64 = sphi 0, %s61
      %s65 = sphi 0, %s64
      %s81 = sphi 0, %s65
      %s87 = sphi 0, %s89
      %s90 = sphi 0, %s87
      %s91 = sphi 0, %s90
      %s107 = sphi 0, %s91
      %s111 = sphi 0, %s111
      %s113 = sphi 0, %s111
      %s114 = sphi 0, %s113
      %s128 = sphi 0, %s114
      %s132 = sphi 0, %s132
      %s134 = sphi 0, %s132
      %s135 = sphi 0, %s134
      %s149 = sphi 0, %s135
      %s153 = sphi 0, %s153
      %s155 = sphi 0, %s153
      %s156 = sphi 0, %s155
      %s170 = sphi 0, %s156
      %s174 = sphi 0, %s174
      %s176 = sphi 0, %s174
      %s177 = sphi 0, %s176
      %s191 = sphi 0, %s177
      %s195 = sphi 0, %s195
      %s197 = sphi 0, %s195
      %s198 = sphi 0, %s197
      %s212 = sphi 0, %s198
      %s218 = sphi 0, %s220
      %s221 = sphi 0, %s218
      %s222 = sphi 0, %s221
      %s238 = sphi 0, %s222
    $region4: #{tpu_custom_call.1} parent=1 // loop_header_branch
      %28 = sbr.rel (%p26) target = $region8
    $region5: #{tpu_custom_call.1} parent=1 // loop_body
      %s30 = ssub.s32 %s25, 1
      %s31 = ssub.s32 %s25, 2
      %s32 = sadd.s32 %s25, 1
      %s33 = ssub.s32 %s25, %s32
      %p34 = scmp.eq.s32.totalorder %s33, 0
      %s36 = sadd.s32 %s35, 1
      %s37 = scalar_select %p34, %s35, %s36
      %p40 = pneg %p34
      %p41 = scmp.eq.s32.totalorder %s25, 1
      %p42 = por %p40, %p41
      %p43 = scmp.ne.s32.totalorder %s35, %s38
      %p44 = scmp.eq.s32.totalorder %s25, 0
      %p45 = por %p43, %p44
      %p46 = scmp.ne.s32.totalorder %s35, %s38
      %p47 = scmp.eq.s32.totalorder %s30, 1
      %p48 = por %p46, %p47
      %p49 = scmp.ne.s32.totalorder %s38, %s39
      %p50 = scmp.eq.s32.totalorder %s30, 0
      %p51 = por %p49, %p50
      %p52 = scmp.ne.s32.totalorder %s38, %s39
      %p53 = scmp.eq.s32.totalorder %s31, 1
      %p54 = por %p52, %p53
      %p56 = scmp.ne.s32.totalorder %s39, %s55
      %p57 = scmp.eq.s32.totalorder %s31, 0
      %p58 = por %p56, %p57
      %s59 = ssub.s32 %s25, %s32
      %p60 = scmp.eq.s32.totalorder %s59, 0
      %s62 = sadd.s32 %s61, 1
      %s63 = scalar_select %p60, %s61, %s62
      %p66 = pneg %p60
      %p67 = scmp.eq.s32.totalorder %s25, 1
      %p68 = por %p66, %p67
      %p69 = scmp.ne.s32.totalorder %s61, %s64
      %p70 = scmp.eq.s32.totalorder %s25, 0
      %p71 = por %p69, %p70
      %p72 = scmp.ne.s32.totalorder %s61, %s64
      %p73 = scmp.eq.s32.totalorder %s30, 1
      %p74 = por %p72, %p73
      %p75 = scmp.ne.s32.totalorder %s64, %s65
      %p76 = scmp.eq.s32.totalorder %s30, 0
      %p77 = por %p75, %p76
      %p78 = scmp.ne.s32.totalorder %s64, %s65
      %p79 = scmp.eq.s32.totalorder %s31, 1
      %p80 = por %p78, %p79
      %p82 = scmp.ne.s32.totalorder %s65, %s81
      %p83 = scmp.eq.s32.totalorder %s31, 0
      %p84 = por %p82, %p83
      %s85 = ssub.s32 %s25, %s32
      %p86 = scmp.eq.s32.totalorder %s85, 0
      %s88 = sadd.s32 %s87, 1
      %s89 = scalar_select %p86, %s87, %s88
      %p92 = pneg %p86
      %p93 = scmp.eq.s32.totalorder %s25, 1
      %p94 = por %p92, %p93
      %p95 = scmp.ne.s32.totalorder %s87, %s90
      %p96 = scmp.eq.s32.totalorder %s25, 0
      %p97 = por %p95, %p96
      %p98 = scmp.ne.s32.totalorder %s87, %s90
      %p99 = scmp.eq.s32.totalorder %s30, 1
      %p100 = por %p98, %p99
      %p101 = scmp.ne.s32.totalorder %s90, %s91
      %p102 = scmp.eq.s32.totalorder %s30, 0
      %p103 = por %p101, %p102
      %p104 = scmp.ne.s32.totalorder %s90, %s91
      %p105 = scmp.eq.s32.totalorder %s31, 1
      %p106 = por %p104, %p105
      %p108 = scmp.ne.s32.totalorder %s91, %s107
      %p109 = scmp.eq.s32.totalorder %s31, 0
      %p110 = por %p108, %p109
      %s112 = sadd.s32 %s111, 1
      %p115 = scmp.eq.s32.totalorder %s25, 1
      %p116 = scmp.ne.s32.totalorder %s111, %s113
      %p117 = scmp.eq.s32.totalorder %s25, 0
      %p118 = por %p116, %p117
      %p119 = scmp.ne.s32.totalorder %s111, %s113
      %p120 = scmp.eq.s32.totalorder %s30, 1
      %p121 = por %p119, %p120
      %p122 = scmp.ne.s32.totalorder %s113, %s114
      %p123 = scmp.eq.s32.totalorder %s30, 0
      %p124 = por %p122, %p123
      %p125 = scmp.ne.s32.totalorder %s113, %s114
      %p126 = scmp.eq.s32.totalorder %s31, 1
      %p127 = por %p125, %p126
      %p129 = scmp.ne.s32.totalorder %s114, %s128
      %p130 = scmp.eq.s32.totalorder %s31, 0
      %p131 = por %p129, %p130
      %s133 = sadd.s32 %s132, 1
      %p136 = scmp.eq.s32.totalorder %s25, 1
      %p137 = scmp.ne.s32.totalorder %s132, %s134
      %p138 = scmp.eq.s32.totalorder %s25, 0
      %p139 = por %p137, %p138
      %p140 = scmp.ne.s32.totalorder %s132, %s134
      %p141 = scmp.eq.s32.totalorder %s30, 1
      %p142 = por %p140, %p141
      %p143 = scmp.ne.s32.totalorder %s134, %s135
      %p144 = scmp.eq.s32.totalorder %s30, 0
      %p145 = por %p143, %p144
      %p146 = scmp.ne.s32.totalorder %s134, %s135
      %p147 = scmp.eq.s32.totalorder %s31, 1
      %p148 = por %p146, %p147
      %p150 = scmp.ne.s32.totalorder %s135, %s149
      %p151 = scmp.eq.s32.totalorder %s31, 0
      %p152 = por %p150, %p151
      %s154 = sadd.s32 %s153, 1
      %p157 = scmp.eq.s32.totalorder %s25, 1
      %p158 = scmp.ne.s32.totalorder %s153, %s155
      %p159 = scmp.eq.s32.totalorder %s25, 0
      %p160 = por %p158, %p159
      %p161 = scmp.ne.s32.totalorder %s153, %s155
      %p162 = scmp.eq.s32.totalorder %s30, 1
      %p163 = por %p161, %p162
      %p164 = scmp.ne.s32.totalorder %s155, %s156
      %p165 = scmp.eq.s32.totalorder %s30, 0
      %p166 = por %p164, %p165
      %p167 = scmp.ne.s32.totalorder %s155, %s156
      %p168 = scmp.eq.s32.totalorder %s31, 1
      %p169 = por %p167, %p168
      %p171 = scmp.ne.s32.totalorder %s156, %s170
      %p172 = scmp.eq.s32.totalorder %s31, 0
      %p173 = por %p171, %p172
      %s175 = sadd.s32 %s174, 1
      %p178 = scmp.eq.s32.totalorder %s25, 1
      %p179 = scmp.ne.s32.totalorder %s174, %s176
      %p180 = scmp.eq.s32.totalorder %s25, 0
      %p181 = por %p179, %p180
      %p182 = scmp.ne.s32.totalorder %s174, %s176
      %p183 = scmp.eq.s32.totalorder %s30, 1
      %p184 = por %p182, %p183
      %p185 = scmp.ne.s32.totalorder %s176, %s177
      %p186 = scmp.eq.s32.totalorder %s30, 0
      %p187 = por %p185, %p186
      %p188 = scmp.ne.s32.totalorder %s176, %s177
      %p189 = scmp.eq.s32.totalorder %s31, 1
      %p190 = por %p188, %p189
      %p192 = scmp.ne.s32.totalorder %s177, %s191
      %p193 = scmp.eq.s32.totalorder %s31, 0
      %p194 = por %p192, %p193
      %s196 = sadd.s32 %s195, 1
      %p199 = scmp.eq.s32.totalorder %s25, 1
      %p200 = scmp.ne.s32.totalorder %s195, %s197
      %p201 = scmp.eq.s32.totalorder %s25, 0
      %p202 = por %p200, %p201
      %p203 = scmp.ne.s32.totalorder %s195, %s197
      %p204 = scmp.eq.s32.totalorder %s30, 1
      %p205 = por %p203, %p204
      %p206 = scmp.ne.s32.totalorder %s197, %s198
      %p207 = scmp.eq.s32.totalorder %s30, 0
      %p208 = por %p206, %p207
      %p209 = scmp.ne.s32.totalorder %s197, %s198
      %p210 = scmp.eq.s32.totalorder %s31, 1
      %p211 = por %p209, %p210
      %p213 = scmp.ne.s32.totalorder %s198, %s212
      %p214 = scmp.eq.s32.totalorder %s31, 0
      %p215 = por %p213, %p214
      %s216 = ssub.s32 %s25, %s32
      %p217 = scmp.eq.s32.totalorder %s216, 0
      %s219 = sadd.s32 %s218, 1
      %s220 = scalar_select %p217, %s218, %s219
      %p223 = pneg %p217
      %p224 = scmp.eq.s32.totalorder %s25, 1
      %p225 = por %p223, %p224
      %p226 = scmp.ne.s32.totalorder %s218, %s221
      %p227 = scmp.eq.s32.totalorder %s25, 0
      %p228 = por %p226, %p227
      %p229 = scmp.ne.s32.totalorder %s218, %s221
      %p230 = scmp.eq.s32.totalorder %s30, 1
      %p231 = por %p229, %p230
      %p232 = scmp.ne.s32.totalorder %s221, %s222
      %p233 = scmp.eq.s32.totalorder %s30, 0
      %p234 = por %p232, %p233
      %p235 = scmp.ne.s32.totalorder %s221, %s222
      %p236 = scmp.eq.s32.totalorder %s31, 1
      %p237 = por %p235, %p236
      %p239 = scmp.ne.s32.totalorder %s222, %s238
      %p240 = scmp.eq.s32.totalorder %s31, 0
      %p241 = por %p239, %p240
      %p242 = scmp.le.s32.totalorder 1, %s25
      %p243 = scmp.lt.s32.totalorder %s25, 3
      %p244 = pnand %p242, %p243
      %p245 = pneg %p244
      // Predicated region
      $region9: #{tpu_custom_call.1} parent=5 // pred_check
        _
      $region10: #{tpu_custom_call.1} parent=5 // pred_check_branch
        %247 = sbr.rel (%p244) target = $region12
      $region11: #{tpu_custom_call.1} parent=5 // pred_region
        %s248 = ssub.s32 %s25, 1
        // Predicated region
        $region13: #{tpu_custom_call.1} parent=11 // pred_check
          %p249 = pneg %p124
        $region14: #{tpu_custom_call.1} parent=11 // pred_check_branch
          %251 = sbr.rel (%p249) target = $region16
        $region15: #{tpu_custom_call.1} parent=11 // pred_region
          %s253 = ssub.s32 512, 512
          %254 = vsyncadd [#allocation10], %s253
          %s255 = sshll.u32 [#allocation9], 4
          %s256 = int_to_ptr.vmem [resolvable:$true] %s255
          %261 = dma.hbm_to_vmem [thread:$0]  %s3, 512, %s256, [#allocation10], 128, 128, 8
        $region16: #{tpu_custom_call.1} parent=11 // pred_fallthru
          _
        // Predicated region
        $region17: #{tpu_custom_call.1} parent=11 // pred_check
          %p262 = pneg %p145
        $region18: #{tpu_custom_call.1} parent=11 // pred_check_branch
          %264 = sbr.rel (%p262) target = $region20
        $region19: #{tpu_custom_call.1} parent=11 // pred_region
          %s266 = ssub.s32 512, 512
          %267 = vsyncadd [#allocation10], %s266
          %s268 = sshll.u32 [#allocation11], 4
          %s269 = int_to_ptr.vmem [resolvable:$true] %s268
          %274 = dma.hbm_to_vmem [thread:$0]  %s4, 512, %s269, [#allocation10], 128, 128, 8
        $region20: #{tpu_custom_call.1} parent=11 // pred_fallthru
          _
        // Predicated region
        $region21: #{tpu_custom_call.1} parent=11 // pred_check
          %p275 = pneg %p166
        $region22: #{tpu_custom_call.1} parent=11 // pred_check_branch
          %277 = sbr.rel (%p275) target = $region24
        $region23: #{tpu_custom_call.1} parent=11 // pred_region
          %s279 = ssub.s32 512, 512
          %280 = vsyncadd [#allocation13], %s279
          %s281 = sshll.u32 [#allocation12], 4
          %s282 = int_to_ptr.vmem [resolvable:$true] %s281
          %287 = dma.hbm_to_vmem [thread:$0]  %s5, 512, %s282, [#allocation13], 128, 128, 8
        $region24: #{tpu_custom_call.1} parent=11 // pred_fallthru
          _
        // Predicated region
        $region25: #{tpu_custom_call.1} parent=11 // pred_check
          %p288 = pneg %p187
        $region26: #{tpu_custom_call.1} parent=11 // pred_check_branch
          %290 = sbr.rel (%p288) target = $region28
        $region27: #{tpu_custom_call.1} parent=11 // pred_region
          %s292 = ssub.s32 512, 512
          %293 = vsyncadd [#allocation13], %s292
          %s294 = sshll.u32 [#allocation14], 4
          %s295 = int_to_ptr.vmem [resolvable:$true] %s294
          %300 = dma.hbm_to_vmem [thread:$0]  %s6, 512, %s295, [#allocation13], 128, 128, 8
        $region28: #{tpu_custom_call.1} parent=11 // pred_fallthru
          _
        // Predicated region
        $region29: #{tpu_custom_call.1} parent=11 // pred_check
          %p301 = pneg %p208
        $region30: #{tpu_custom_call.1} parent=11 // pred_check_branch
          %303 = sbr.rel (%p301) target = $region32
        $region31: #{tpu_custom_call.1} parent=11 // pred_region
          _
        $region32: #{tpu_custom_call.1} parent=11 // pred_fallthru
          _
      $region12: #{tpu_custom_call.1} parent=5 // pred_fallthru
        _
      %p304 = scmp.lt.s32.totalorder %s25, 2
      // Predicated region
      $region33: #{tpu_custom_call.1} parent=5 // pred_check
        %p305 = pneg %p304
      $region34: #{tpu_custom_call.1} parent=5 // pred_check_branch
        %307 = sbr.rel (%p305) target = $region36
      $region35: #{tpu_custom_call.1} parent=5 // pred_region
        // Predicated region
        $region37: #{tpu_custom_call.1} parent=35 // pred_check
          %p308 = pneg %p45
        $region38: #{tpu_custom_call.1} parent=35 // pred_check_branch
          %310 = sbr.rel (%p308) target = $region40
        $region39: #{tpu_custom_call.1} parent=35 // pred_region
          %s311 = sand.u32 %s35, 1
          %s312 = scalar_lea.sflag [#allocation4], %s311
          %s313 = sand.u32 %s35, 1
          %s314 = smul.addr %s313, 16
          %s315 = scalar_lea.vmem [#allocation3], %s314
          %s316 = smul.u32 2, %s25
          %s318 = ssub.s32 256, 256
          %319 = vsyncadd %s312, %s318
          %s320 = smul.addr %s316, 128
          %s321 = scalar_lea.hbm %s0, %s320
          %s322 = sshll.u32 %s315, 4
          %s323 = int_to_ptr.vmem [resolvable:$true] %s322
          %328 = dma.hbm_to_vmem [thread:$0]  %s321, 256, %s323, %s312, 128, 128, 8
        $region40: #{tpu_custom_call.1} parent=35 // pred_fallthru
          _
        // Predicated region
        $region41: #{tpu_custom_call.1} parent=35 // pred_check
          %p329 = pneg %p71
        $region42: #{tpu_custom_call.1} parent=35 // pred_check_branch
          %331 = sbr.rel (%p329) target = $region44
        $region43: #{tpu_custom_call.1} parent=35 // pred_region
          %s332 = sand.u32 %s25, 1
          %s333 = scalar_lea.sflag [#allocation7], %s332
          %s334 = sand.u32 %s61, 1
          %s335 = smul.addr %s334, 16
          %s336 = scalar_lea.vmem [#allocation6], %s335
          %s337 = smul.u32 2, %s25
          %s339 = ssub.s32 256, 256
          %340 = vsyncadd %s333, %s339
          %s341 = smul.addr %s337, 128
          %s342 = scalar_lea.hbm %s1, %s341
          %s343 = sshll.u32 %s336, 4
          %s344 = int_to_ptr.vmem [resolvable:$true] %s343
          %349 = dma.hbm_to_vmem [thread:$0]  %s342, 256, %s344, %s333, 128, 128, 8
        $region44: #{tpu_custom_call.1} parent=35 // pred_fallthru
          _
        // Predicated region
        $region45: #{tpu_custom_call.1} parent=35 // pred_check
          %p350 = pneg %p97
        $region46: #{tpu_custom_call.1} parent=35 // pred_check_branch
          %352 = sbr.rel (%p350) target = $region48
        $region47: #{tpu_custom_call.1} parent=35 // pred_region
          %s353 = sand.u32 %s25, 1
          %s354 = scalar_lea.sflag [#allocation7], %s353
          %s355 = sand.u32 %s87, 1
          %s356 = smul.addr %s355, 16
          %s357 = scalar_lea.vmem [#allocation8], %s356
          %s358 = smul.u32 2, %s25
          %s360 = ssub.s32 256, 256
          %361 = vsyncadd %s354, %s360
          %s362 = smul.addr %s358, 128
          %s363 = scalar_lea.hbm %s2, %s362
          %s364 = sshll.u32 %s357, 4
          %s365 = int_to_ptr.vmem [resolvable:$true] %s364
          %370 = dma.hbm_to_vmem [thread:$0]  %s363, 256, %s365, %s354, 128, 128, 8
        $region48: #{tpu_custom_call.1} parent=35 // pred_fallthru
          _
      $region36: #{tpu_custom_call.1} parent=5 // pred_fallthru
        _
      %p371 = scmp.le.s32.totalorder 1, %s25
      %p372 = scmp.lt.s32.totalorder %s25, 3
      %p373 = pnand %p371, %p372
      %p374 = pneg %p373
      // Predicated region
      $region49: #{tpu_custom_call.1} parent=5 // pred_check
        _
      $region50: #{tpu_custom_call.1} parent=5 // pred_check_branch
        %376 = sbr.rel (%p373) target = $region52
      $region51: #{tpu_custom_call.1} parent=5 // pred_region
        %s377 = ssub.s32 %s25, 1
        %s378 = sand.u32 %s38, 1
        %s379 = scalar_lea.sflag [#allocation4], %s378
        %s380 = sand.u32 %s38, 1
        %s381 = smul.addr %s380, 16
        %s382 = scalar_lea.vmem [#allocation3], %s381
        // Predicated region
        $region53: #{tpu_custom_call.1} parent=51 // pred_check
          %p383 = pneg %p51
        $region54: #{tpu_custom_call.1} parent=51 // pred_check_branch
          %385 = sbr.rel (%p383) target = $region56
        $region55: #{tpu_custom_call.1} parent=51 // pred_region
          %386 = dma.done %s379, 256
        $region56: #{tpu_custom_call.1} parent=51 // pred_fallthru
          _
        %s387 = sand.u32 %s30, 1
        %s388 = scalar_lea.sflag [#allocation7], %s387
        %s389 = sand.u32 %s64, 1
        %s390 = smul.addr %s389, 16
        %s391 = scalar_lea.vmem [#allocation6], %s390
        // Predicated region
        $region57: #{tpu_custom_call.1} parent=51 // pred_check
          %p392 = pneg %p77
        $region58: #{tpu_custom_call.1} parent=51 // pred_check_branch
          %394 = sbr.rel (%p392) target = $region60
        $region59: #{tpu_custom_call.1} parent=51 // pred_region
          %395 = dma.done %s388, 256
        $region60: #{tpu_custom_call.1} parent=51 // pred_fallthru
          _
        %s396 = sand.u32 %s30, 1
        %s397 = scalar_lea.sflag [#allocation7], %s396
        %s398 = sand.u32 %s90, 1
        %s399 = smul.addr %s398, 16
        %s400 = scalar_lea.vmem [#allocation8], %s399
        // Predicated region
        $region61: #{tpu_custom_call.1} parent=51 // pred_check
          %p401 = pneg %p103
        $region62: #{tpu_custom_call.1} parent=51 // pred_check_branch
          %403 = sbr.rel (%p401) target = $region64
        $region63: #{tpu_custom_call.1} parent=51 // pred_region
          %404 = dma.done %s397, 256
        $region64: #{tpu_custom_call.1} parent=51 // pred_fallthru
          _
        // Predicated region
        $region65: #{tpu_custom_call.1} parent=51 // pred_check
          %p405 = pneg %p124
        $region66: #{tpu_custom_call.1} parent=51 // pred_check_branch
          %407 = sbr.rel (%p405) target = $region68
        $region67: #{tpu_custom_call.1} parent=51 // pred_region
          %408 = dma.done [#allocation10], 512
        $region68: #{tpu_custom_call.1} parent=51 // pred_fallthru
          _
        // Predicated region
        $region69: #{tpu_custom_call.1} parent=51 // pred_check
          %p409 = pneg %p145
        $region70: #{tpu_custom_call.1} parent=51 // pred_check_branch
          %411 = sbr.rel (%p409) target = $region72
        $region71: #{tpu_custom_call.1} parent=51 // pred_region
          %412 = dma.done [#allocation10], 512
        $region72: #{tpu_custom_call.1} parent=51 // pred_fallthru
          _
        // Predicated region
        $region73: #{tpu_custom_call.1} parent=51 // pred_check
          %p413 = pneg %p166
        $region74: #{tpu_custom_call.1} parent=51 // pred_check_branch
          %415 = sbr.rel (%p413) target = $region76
        $region75: #{tpu_custom_call.1} parent=51 // pred_region
          %416 = dma.done [#allocation13], 512
        $region76: #{tpu_custom_call.1} parent=51 // pred_fallthru
          _
        // Predicated region
        $region77: #{tpu_custom_call.1} parent=51 // pred_check
          %p417 = pneg %p187
        $region78: #{tpu_custom_call.1} parent=51 // pred_check_branch
          %419 = sbr.rel (%p417) target = $region80
        $region79: #{tpu_custom_call.1} parent=51 // pred_region
          %420 = dma.done [#allocation13], 512
        $region80: #{tpu_custom_call.1} parent=51 // pred_fallthru
          _
        %s421 = sand.u32 %s38, 1
        %s422 = scalar_lea.sflag [#allocation4], %s421
        %s423 = sand.u32 %s38, 1
        %s424 = smul.addr %s423, 16
        %s425 = scalar_lea.vmem [#allocation3], %s424
        %p426 = pneg %p51
        %p427 = pneg %p48
        %s428 = sand.u32 %s30, 1
        %s429 = scalar_lea.sflag [#allocation7], %s428
        %s430 = sand.u32 %s64, 1
        %s431 = smul.addr %s430, 16
        %s432 = scalar_lea.vmem [#allocation6], %s431
        %p433 = pneg %p77
        %p434 = pneg %p74
        %s435 = sand.u32 %s30, 1
        %s436 = scalar_lea.sflag [#allocation7], %s435
        %s437 = sand.u32 %s90, 1
        %s438 = smul.addr %s437, 16
        %s439 = scalar_lea.vmem [#allocation8], %s438
        %p440 = pneg %p103
        %p441 = pneg %p100
        %p442 = pneg %p124
        %p443 = pneg %p121
        %p444 = pneg %p145
        %p445 = pneg %p142
        %p446 = pneg %p166
        %p447 = pneg %p163
        %p448 = pneg %p187
        %p449 = pneg %p184
        %p450 = pneg %p208
        %p451 = pneg %p205
        %p452 = pneg %p234
        %p453 = pneg %p231
        %s454 = sand.u32 %s221, 1
        %s455 = scalar_lea.sflag [#allocation5], %s454
        %s456 = sand.u32 %s221, 1
        %s457 = smul.addr %s456, 16
        %s458 = scalar_lea.vmem [#allocation15], %s457
        %s459 = smul.u32 2, %s30
        %s460 = smul.u32 2, %s30
        %s461 = smul.u32 2, %s30
        %s462 = smul.u32 2, %s30
        %v463 = vld [vmem:[%s382] sm:$0xff]
        %v464 = vld [vmem:[%s382 + $0x8] sm:$0xff]
        %v465 = vld [vmem:[%s391] sm:$0xff]
        %v466 = vld [vmem:[%s391 + $0x8] sm:$0xff]
        %v467 = vld [vmem:[%s400] sm:$0xff]
        %v468 = vld [vmem:[%s400 + $0x8] sm:$0xff]
        %v469 = vld [vmem:[#allocation9] sm:$0xff]
        %v470 = vld [vmem:[#allocation9 + $0x8] sm:$0xff]
        %v471 = vld [vmem:[#allocation9 + $0x10] sm:$0xff]
        %v472 = vld [vmem:[#allocation9 + $0x18] sm:$0xff]
        %vm473 = vcmask 261120
        %v475 = vsel %vm473, %v463, 0
        %v478 = vsel %vm473, %v464, 0
        %v481 = vsel %vm473, %v469, 0
        %v484 = vsel %vm473, %v470, 0
        %v487 = vsel %vm473, %v471, 0
        %v490 = vsel %vm473, %v472, 0
        %492 = vmatprep.subr.mxu0 0.0
        %493 = vmatpush1.xpose.msra.mxu0 %v481
        %494 = vmatprep.subr.mxu0 0.0
        %495 = vmatpush1.xpose.msra.mxu0 %v484
        %496 = vmatprep.subr.mxu0 0.0
        %497 = vmatpush1.xpose.msra.mxu0 %v487
        %498 = vmatprep.subr.mxu0 0.0
        %499 = vmatpush1.xpose.msra.mxu0 %v490
        %500 = vmatprep.subr.mxu0 0.0
        %501 = vmatpush1.xpose.msra.mxu0 0.0
        %502 = vmatprep.subr.mxu0 0.0
        %503 = vmatpush1.xpose.msra.mxu0 0.0
        %504 = vmatprep.subr.mxu0 0.0
        %505 = vmatpush1.xpose.msra.mxu0 0.0
        %506 = vmatprep.subr.mxu0 0.0
        %507 = vmatpush1.xpose.msra.mxu0 0.0
        %508 = vmatprep.subr.mxu0 0.0
        %509 = vmatpush1.xpose.msra.mxu0 0.0
        %510 = vmatprep.subr.mxu0 0.0
        %511 = vmatpush1.xpose.msra.mxu0 0.0
        %512 = vmatprep.subr.mxu0 0.0
        %513 = vmatpush1.xpose.msra.mxu0 0.0
        %514 = vmatprep.subr.mxu0 0.0
        %515 = vmatpush1.xpose.msra.mxu0 0.0
        %516 = vmatprep.subr.mxu0 0.0
        %517 = vmatpush1.xpose.msra.mxu0 0.0
        %518 = vmatprep.subr.mxu0 0.0
        %519 = vmatpush1.xpose.msra.mxu0 0.0
        %520 = vmatprep.subr.mxu0 0.0
        %521 = vmatpush1.xpose.msra.mxu0 0.0
        %522 = vmatprep.subr.mxu0 0.0
        %523 = vmatpush1.xpose.msra.mxu0 0.0
        %524 = vmatprep.subr.mxu0 0.0
        %525 = vmatpush1.xpose.msra.mxu0 0.0
        %526 = vmatprep.subr.mxu0 0.0
        %527 = vmatpush1.xpose.msra.mxu0 0.0
        %528 = vmatprep.subr.mxu0 0.0
        %529 = vmatpush1.xpose.msra.mxu0 0.0
        %530 = vmatprep.subr.mxu0 0.0
        %531 = vmatpush1.xpose.msra.mxu0 0.0
        %532 = vmatprep.subr.mxu0 0.0
        %533 = vmatpush1.xpose.msra.mxu0 0.0
        %534 = vmatprep.subr.mxu0 0.0
        %535 = vmatpush1.xpose.msra.mxu0 0.0
        %536 = vmatprep.subr.mxu0 0.0
        %537 = vmatpush1.xpose.msra.mxu0 0.0
        %538 = vmatprep.subr.mxu0 0.0
        %539 = vmatpush1.xpose.msra.mxu0 0.0
        %540 = vmatprep.subr.mxu0 0.0
        %541 = vmatpush1.xpose.msra.mxu0 0.0
        %542 = vmatprep.subr.mxu0 0.0
        %543 = vmatpush1.xpose.msra.mxu0 0.0
        %544 = vmatprep.subr.mxu0 0.0
        %545 = vmatpush1.xpose.msra.mxu0 0.0
        %546 = vmatprep.subr.mxu0 0.0
        %547 = vmatpush1.xpose.msra.mxu0 0.0
        %548 = vmatprep.subr.mxu0 0.0
        %549 = vmatpush1.xpose.msra.mxu0 0.0
        %550 = vmatprep.subr.mxu0 0.0
        %551 = vmatpush1.xpose.msra.mxu0 0.0
        %552 = vmatprep.subr.mxu0 0.0
        %553 = vmatpush1.xpose.msra.mxu0 0.0
        %554 = vmatprep.subr.mxu0 0.0
        %555 = vmatpush1.xpose.msra.mxu0 0.0
        %556 = vmatprep.mubr.f32.mxu0 0.0
        %557 = vmatmul.mubr.f32.gmra.mrb[0].mxu0 %v475
        %v558 = vpop.f32.mrb[0].mxu0
        %v559 = vadd.f32 0.0, %v558
        %v560 = vpop.f32.mrb[0].mxu0
        %561 = vmatprep.mubr.f32.mxu0 0.0
        %562 = vmatmul.mubr.f32.gmra.mrb[0].mxu0 %v478
        %v563 = vpop.f32.mrb[0].mxu0
        %v564 = vadd.f32 0.0, %v563
        %v565 = vpop.f32.mrb[0].mxu0
        %566 = vdwg.mxu0
        %v567 = vld [vmem:[#allocation11] sm:$0xff]
        %v568 = vld [vmem:[#allocation11 + $0x8] sm:$0xff]
        %v569 = vld [vmem:[#allocation11 + $0x10] sm:$0xff]
        %v570 = vld [vmem:[#allocation11 + $0x18] sm:$0xff]
        %v572 = vsel %vm473, %v465, 0
        %v575 = vsel %vm473, %v466, 0
        %v578 = vsel %vm473, %v567, 0
        %v581 = vsel %vm473, %v568, 0
        %v584 = vsel %vm473, %v569, 0
        %v587 = vsel %vm473, %v570, 0
        %589 = vmatprep.subr.mxu0 0.0
        %590 = vmatpush1.xpose.msra.mxu0 %v578
        %591 = vmatprep.subr.mxu0 0.0
        %592 = vmatpush1.xpose.msra.mxu0 %v581
        %593 = vmatprep.subr.mxu0 0.0
        %594 = vmatpush1.xpose.msra.mxu0 %v584
        %595 = vmatprep.subr.mxu0 0.0
        %596 = vmatpush1.xpose.msra.mxu0 %v587
        %597 = vmatprep.subr.mxu0 0.0
        %598 = vmatpush1.xpose.msra.mxu0 0.0
        %599 = vmatprep.subr.mxu0 0.0
        %600 = vmatpush1.xpose.msra.mxu0 0.0
        %601 = vmatprep.subr.mxu0 0.0
        %602 = vmatpush1.xpose.msra.mxu0 0.0
        %603 = vmatprep.subr.mxu0 0.0
        %604 = vmatpush1.xpose.msra.mxu0 0.0
        %605 = vmatprep.subr.mxu0 0.0
        %606 = vmatpush1.xpose.msra.mxu0 0.0
        %607 = vmatprep.subr.mxu0 0.0
        %608 = vmatpush1.xpose.msra.mxu0 0.0
        %609 = vmatprep.subr.mxu0 0.0
        %610 = vmatpush1.xpose.msra.mxu0 0.0
        %611 = vmatprep.subr.mxu0 0.0
        %612 = vmatpush1.xpose.msra.mxu0 0.0
        %613 = vmatprep.subr.mxu0 0.0
        %614 = vmatpush1.xpose.msra.mxu0 0.0
        %615 = vmatprep.subr.mxu0 0.0
        %616 = vmatpush1.xpose.msra.mxu0 0.0
        %617 = vmatprep.subr.mxu0 0.0
        %618 = vmatpush1.xpose.msra.mxu0 0.0
        %619 = vmatprep.subr.mxu0 0.0
        %620 = vmatpush1.xpose.msra.mxu0 0.0
        %621 = vmatprep.subr.mxu0 0.0
        %622 = vmatpush1.xpose.msra.mxu0 0.0
        %623 = vmatprep.subr.mxu0 0.0
        %624 = vmatpush1.xpose.msra.mxu0 0.0
        %625 = vmatprep.subr.mxu0 0.0
        %626 = vmatpush1.xpose.msra.mxu0 0.0
        %627 = vmatprep.subr.mxu0 0.0
        %628 = vmatpush1.xpose.msra.mxu0 0.0
        %629 = vmatprep.subr.mxu0 0.0
        %630 = vmatpush1.xpose.msra.mxu0 0.0
        %631 = vmatprep.subr.mxu0 0.0
        %632 = vmatpush1.xpose.msra.mxu0 0.0
        %633 = vmatprep.subr.mxu0 0.0
        %634 = vmatpush1.xpose.msra.mxu0 0.0
        %635 = vmatprep.subr.mxu0 0.0
        %636 = vmatpush1.xpose.msra.mxu0 0.0
        %637 = vmatprep.subr.mxu0 0.0
        %638 = vmatpush1.xpose.msra.mxu0 0.0
        %639 = vmatprep.subr.mxu0 0.0
        %640 = vmatpush1.xpose.msra.mxu0 0.0
        %641 = vmatprep.subr.mxu0 0.0
        %642 = vmatpush1.xpose.msra.mxu0 0.0
        %643 = vmatprep.subr.mxu0 0.0
        %644 = vmatpush1.xpose.msra.mxu0 0.0
        %645 = vmatprep.subr.mxu0 0.0
        %646 = vmatpush1.xpose.msra.mxu0 0.0
        %647 = vmatprep.subr.mxu0 0.0
        %648 = vmatpush1.xpose.msra.mxu0 0.0
        %649 = vmatprep.subr.mxu0 0.0
        %650 = vmatpush1.xpose.msra.mxu0 0.0
        %651 = vmatprep.subr.mxu0 0.0
        %652 = vmatpush1.xpose.msra.mxu0 0.0
        %653 = vmatprep.mubr.f32.mxu0 0.0
        %654 = vmatmul.mubr.f32.gmra.mrb[0].mxu0 %v572
        %v655 = vpop.f32.mrb[0].mxu0
        %v656 = vadd.f32 0.0, %v655
        %v657 = vpop.f32.mrb[0].mxu0
        %658 = vmatprep.mubr.f32.mxu0 0.0
        %659 = vmatmul.mubr.f32.gmra.mrb[0].mxu0 %v575
        %v660 = vpop.f32.mrb[0].mxu0
        %v661 = vadd.f32 0.0, %v660
        %v662 = vpop.f32.mrb[0].mxu0
        %663 = vdwg.mxu0
        %v664 = vld [vmem:[#allocation12] sm:$0xff]
        %v665 = vld [vmem:[#allocation12 + $0x8] sm:$0xff]
        %v666 = vld [vmem:[#allocation12 + $0x10] sm:$0xff]
        %v667 = vld [vmem:[#allocation12 + $0x18] sm:$0xff]
        %v669 = vsel %vm473, %v467, 0
        %v672 = vsel %vm473, %v468, 0
        %v675 = vsel %vm473, %v664, 0
        %v678 = vsel %vm473, %v665, 0
        %v681 = vsel %vm473, %v666, 0
        %v684 = vsel %vm473, %v667, 0
        %686 = vmatprep.subr.mxu0 0.0
        %687 = vmatpush1.xpose.msra.mxu0 %v675
        %688 = vmatprep.subr.mxu0 0.0
        %689 = vmatpush1.xpose.msra.mxu0 %v678
        %690 = vmatprep.subr.mxu0 0.0
        %691 = vmatpush1.xpose.msra.mxu0 %v681
        %692 = vmatprep.subr.mxu0 0.0
        %693 = vmatpush1.xpose.msra.mxu0 %v684
        %694 = vmatprep.subr.mxu0 0.0
        %695 = vmatpush1.xpose.msra.mxu0 0.0
        %696 = vmatprep.subr.mxu0 0.0
        %697 = vmatpush1.xpose.msra.mxu0 0.0
        %698 = vmatprep.subr.mxu0 0.0
        %699 = vmatpush1.xpose.msra.mxu0 0.0
        %700 = vmatprep.subr.mxu0 0.0
        %701 = vmatpush1.xpose.msra.mxu0 0.0
        %702 = vmatprep.subr.mxu0 0.0
        %703 = vmatpush1.xpose.msra.mxu0 0.0
        %704 = vmatprep.subr.mxu0 0.0
        %705 = vmatpush1.xpose.msra.mxu0 0.0
        %706 = vmatprep.subr.mxu0 0.0
        %707 = vmatpush1.xpose.msra.mxu0 0.0
        %708 = vmatprep.subr.mxu0 0.0
        %709 = vmatpush1.xpose.msra.mxu0 0.0
        %710 = vmatprep.subr.mxu0 0.0
        %711 = vmatpush1.xpose.msra.mxu0 0.0
        %712 = vmatprep.subr.mxu0 0.0
        %713 = vmatpush1.xpose.msra.mxu0 0.0
        %714 = vmatprep.subr.mxu0 0.0
        %715 = vmatpush1.xpose.msra.mxu0 0.0
        %716 = vmatprep.subr.mxu0 0.0
        %717 = vmatpush1.xpose.msra.mxu0 0.0
        %718 = vmatprep.subr.mxu0 0.0
        %719 = vmatpush1.xpose.msra.mxu0 0.0
        %720 = vmatprep.subr.mxu0 0.0
        %721 = vmatpush1.xpose.msra.mxu0 0.0
        %722 = vmatprep.subr.mxu0 0.0
        %723 = vmatpush1.xpose.msra.mxu0 0.0
        %724 = vmatprep.subr.mxu0 0.0
        %725 = vmatpush1.xpose.msra.mxu0 0.0
        %726 = vmatprep.subr.mxu0 0.0
        %727 = vmatpush1.xpose.msra.mxu0 0.0
        %728 = vmatprep.subr.mxu0 0.0
        %729 = vmatpush1.xpose.msra.mxu0 0.0
        %730 = vmatprep.subr.mxu0 0.0
        %731 = vmatpush1.xpose.msra.mxu0 0.0
        %732 = vmatprep.subr.mxu0 0.0
        %733 = vmatpush1.xpose.msra.mxu0 0.0
        %734 = vmatprep.subr.mxu0 0.0
        %735 = vmatpush1.xpose.msra.mxu0 0.0
        %736 = vmatprep.subr.mxu0 0.0
        %737 = vmatpush1.xpose.msra.mxu0 0.0
        %738 = vmatprep.subr.mxu0 0.0
        %739 = vmatpush1.xpose.msra.mxu0 0.0
        %740 = vmatprep.subr.mxu0 0.0
        %741 = vmatpush1.xpose.msra.mxu0 0.0
        %742 = vmatprep.subr.mxu0 0.0
        %743 = vmatpush1.xpose.msra.mxu0 0.0
        %744 = vmatprep.subr.mxu0 0.0
        %745 = vmatpush1.xpose.msra.mxu0 0.0
        %746 = vmatprep.subr.mxu0 0.0
        %747 = vmatpush1.xpose.msra.mxu0 0.0
        %748 = vmatprep.subr.mxu0 0.0
        %749 = vmatpush1.xpose.msra.mxu0 0.0
        %750 = vmatprep.mubr.f32.mxu0 0.0
        %751 = vmatmul.mubr.f32.gmra.mrb[0].mxu0 %v669
        %v752 = vpop.f32.mrb[0].mxu0
        %v753 = vadd.f32 0.0, %v752
        %v754 = vpop.f32.mrb[0].mxu0
        %755 = vmatprep.mubr.f32.mxu0 0.0
        %756 = vmatmul.mubr.f32.gmra.mrb[0].mxu0 %v672
        %v757 = vpop.f32.mrb[0].mxu0
        %v758 = vadd.f32 0.0, %v757
        %v759 = vpop.f32.mrb[0].mxu0
        %760 = vdwg.mxu0
        %v761 = vmul.f32 %v559, %v559
        %v762 = vmul.f32 %v564, %v564
        %vm763 = vcmask 64512
        %v764 = vsel %vm763, %v761, 0.0
        %765 = vadd.xlane.f32.xlu0 %v764
        %v766 = vpop.xlane.xlu0 %765
        %v767 = vsel %vm763, %v762, 0.0
        %768 = vadd.xlane.f32.xlu0 %v767
        %v769 = vpop.xlane.xlu0 %768
        %v770 = vmul.f32 %v656, %v656
        %v771 = vmul.f32 %v661, %v661
        %v772 = vsel %vm763, %v770, 0.0
        %773 = vadd.xlane.f32.xlu0 %v772
        %v774 = vpop.xlane.xlu0 %773
        %v775 = vsel %vm763, %v771, 0.0
        %776 = vadd.xlane.f32.xlu0 %v775
        %v777 = vpop.xlane.xlu0 %776
        %v779 = vsel %vm763, %v559, 0
        %v782 = vsel %vm763, %v656, 0
        %784 = vmatprep.subr.mxu0 0.0
        %785 = vmatpush1.xpose.msra.mxu0 %v782
        %786 = vmatprep.subr.mxu0 0.0
        %787 = vmatpush1.xpose.msra.mxu0 0.0
        %788 = vmatprep.subr.mxu0 0.0
        %789 = vmatpush1.xpose.msra.mxu0 0.0
        %790 = vmatprep.subr.mxu0 0.0
        %791 = vmatpush1.xpose.msra.mxu0 0.0
        %792 = vmatprep.subr.mxu0 0.0
        %793 = vmatpush1.xpose.msra.mxu0 0.0
        %794 = vmatprep.subr.mxu0 0.0
        %795 = vmatpush1.xpose.msra.mxu0 0.0
        %796 = vmatprep.subr.mxu0 0.0
        %797 = vmatpush1.xpose.msra.mxu0 0.0
        %798 = vmatprep.subr.mxu0 0.0
        %799 = vmatpush1.xpose.msra.mxu0 0.0
        %800 = vmatprep.subr.mxu0 0.0
        %801 = vmatpush1.xpose.msra.mxu0 0.0
        %802 = vmatprep.subr.mxu0 0.0
        %803 = vmatpush1.xpose.msra.mxu0 0.0
        %804 = vmatprep.subr.mxu0 0.0
        %805 = vmatpush1.xpose.msra.mxu0 0.0
        %806 = vmatprep.subr.mxu0 0.0
        %807 = vmatpush1.xpose.msra.mxu0 0.0
        %808 = vmatprep.subr.mxu0 0.0
        %809 = vmatpush1.xpose.msra.mxu0 0.0
        %810 = vmatprep.subr.mxu0 0.0
        %811 = vmatpush1.xpose.msra.mxu0 0.0
        %812 = vmatprep.subr.mxu0 0.0
        %813 = vmatpush1.xpose.msra.mxu0 0.0
        %814 = vmatprep.subr.mxu0 0.0
        %815 = vmatpush1.xpose.msra.mxu0 0.0
        %816 = vmatprep.subr.mxu0 0.0
        %817 = vmatpush1.xpose.msra.mxu0 0.0
        %818 = vmatprep.subr.mxu0 0.0
        %819 = vmatpush1.xpose.msra.mxu0 0.0
        %820 = vmatprep.subr.mxu0 0.0
        %821 = vmatpush1.xpose.msra.mxu0 0.0
        %822 = vmatprep.subr.mxu0 0.0
        %823 = vmatpush1.xpose.msra.mxu0 0.0
        %824 = vmatprep.subr.mxu0 0.0
        %825 = vmatpush1.xpose.msra.mxu0 0.0
        %826 = vmatprep.subr.mxu0 0.0
        %827 = vmatpush1.xpose.msra.mxu0 0.0
        %828 = vmatprep.subr.mxu0 0.0
        %829 = vmatpush1.xpose.msra.mxu0 0.0
        %830 = vmatprep.subr.mxu0 0.0
        %831 = vmatpush1.xpose.msra.mxu0 0.0
        %832 = vmatprep.subr.mxu0 0.0
        %833 = vmatpush1.xpose.msra.mxu0 0.0
        %834 = vmatprep.subr.mxu0 0.0
        %835 = vmatpush1.xpose.msra.mxu0 0.0
        %836 = vmatprep.subr.mxu0 0.0
        %837 = vmatpush1.xpose.msra.mxu0 0.0
        %838 = vmatprep.subr.mxu0 0.0
        %839 = vmatpush1.xpose.msra.mxu0 0.0
        %840 = vmatprep.subr.mxu0 0.0
        %841 = vmatpush1.xpose.msra.mxu0 0.0
        %842 = vmatprep.subr.mxu0 0.0
        %843 = vmatpush1.xpose.msra.mxu0 0.0
        %844 = vmatprep.subr.mxu0 0.0
        %845 = vmatpush1.xpose.msra.mxu0 0.0
        %846 = vmatprep.subr.mxu0 0.0
        %847 = vmatpush1.xpose.msra.mxu0 0.0
        %848 = vmatprep.mubr.f32.mxu0 0.0
        %849 = vmatmul.mubr.f32.gmra.mrb[0].mxu0 %v779
        %v850 = vpop.f32.mrb[0].mxu0
        %v851 = vadd.f32 0.0, %v850
        %v852 = vpop.f32.mrb[0].mxu0
        %853 = vdwg.mxu0
        %v855 = vsel %vm763, %v564, 0
        %v858 = vsel %vm763, %v661, 0
        %860 = vmatprep.subr.mxu0 0.0
        %861 = vmatpush1.xpose.msra.mxu0 %v858
        %862 = vmatprep.subr.mxu0 0.0
        %863 = vmatpush1.xpose.msra.mxu0 0.0
        %864 = vmatprep.subr.mxu0 0.0
        %865 = vmatpush1.xpose.msra.mxu0 0.0
        %866 = vmatprep.subr.mxu0 0.0
        %867 = vmatpush1.xpose.msra.mxu0 0.0
        %868 = vmatprep.subr.mxu0 0.0
        %869 = vmatpush1.xpose.msra.mxu0 0.0
        %870 = vmatprep.subr.mxu0 0.0
        %871 = vmatpush1.xpose.msra.mxu0 0.0
        %872 = vmatprep.subr.mxu0 0.0
        %873 = vmatpush1.xpose.msra.mxu0 0.0
        %874 = vmatprep.subr.mxu0 0.0
        %875 = vmatpush1.xpose.msra.mxu0 0.0
        %876 = vmatprep.subr.mxu0 0.0
        %877 = vmatpush1.xpose.msra.mxu0 0.0
        %878 = vmatprep.subr.mxu0 0.0
        %879 = vmatpush1.xpose.msra.mxu0 0.0
        %880 = vmatprep.subr.mxu0 0.0
        %881 = vmatpush1.xpose.msra.mxu0 0.0
        %882 = vmatprep.subr.mxu0 0.0
        %883 = vmatpush1.xpose.msra.mxu0 0.0
        %884 = vmatprep.subr.mxu0 0.0
        %885 = vmatpush1.xpose.msra.mxu0 0.0
        %886 = vmatprep.subr.mxu0 0.0
        %887 = vmatpush1.xpose.msra.mxu0 0.0
        %888 = vmatprep.subr.mxu0 0.0
        %889 = vmatpush1.xpose.msra.mxu0 0.0
        %890 = vmatprep.subr.mxu0 0.0
        %891 = vmatpush1.xpose.msra.mxu0 0.0
        %892 = vmatprep.subr.mxu0 0.0
        %893 = vmatpush1.xpose.msra.mxu0 0.0
        %894 = vmatprep.subr.mxu0 0.0
        %895 = vmatpush1.xpose.msra.mxu0 0.0
        %896 = vmatprep.subr.mxu0 0.0
        %897 = vmatpush1.xpose.msra.mxu0 0.0
        %898 = vmatprep.subr.mxu0 0.0
        %899 = vmatpush1.xpose.msra.mxu0 0.0
        %900 = vmatprep.subr.mxu0 0.0
        %901 = vmatpush1.xpose.msra.mxu0 0.0
        %902 = vmatprep.subr.mxu0 0.0
        %903 = vmatpush1.xpose.msra.mxu0 0.0
        %904 = vmatprep.subr.mxu0 0.0
        %905 = vmatpush1.xpose.msra.mxu0 0.0
        %906 = vmatprep.subr.mxu0 0.0
        %907 = vmatpush1.xpose.msra.mxu0 0.0
        %908 = vmatprep.subr.mxu0 0.0
        %909 = vmatpush1.xpose.msra.mxu0 0.0
        %910 = vmatprep.subr.mxu0 0.0
        %911 = vmatpush1.xpose.msra.mxu0 0.0
        %912 = vmatprep.subr.mxu0 0.0
        %913 = vmatpush1.xpose.msra.mxu0 0.0
        %914 = vmatprep.subr.mxu0 0.0
        %915 = vmatpush1.xpose.msra.mxu0 0.0
        %916 = vmatprep.subr.mxu0 0.0
        %917 = vmatpush1.xpose.msra.mxu0 0.0
        %918 = vmatprep.subr.mxu0 0.0
        %919 = vmatpush1.xpose.msra.mxu0 0.0
        %920 = vmatprep.subr.mxu0 0.0
        %921 = vmatpush1.xpose.msra.mxu0 0.0
        %922 = vmatprep.subr.mxu0 0.0
        %923 = vmatpush1.xpose.msra.mxu0 0.0
        %924 = vmatprep.mubr.f32.mxu0 0.0
        %925 = vmatmul.mubr.f32.gmra.mrb[0].mxu0 %v855
        %v926 = vpop.f32.mrb[0].mxu0
        %v927 = vadd.f32 0.0, %v926
        %v928 = vpop.f32.mrb[0].mxu0
        %929 = vdwg.mxu0
        %v932 = vlaneseq
        %v933 = vand.u32 %v932, 127
        %v934 = vlaneseq
        %v935 = vshrl.u32 %v934, 7
        %v936 = vsub.s32 %v933, %v935
        %v937 = vrot.slane %v774, %v936
        %v938 = vlaneseq
        %v939 = vshrl.u32 %v938, 7
        %v940 = vsub.s32 %v933, %v939
        %v941 = vrot.slane %v777, %v940
        %vm942 = vcmask 1042434
        %v943 = vsel %vm942, %v937, %v937
        %vm944 = vcmask 1043459
        %v945 = vsel %vm944, %v937, %v943
        %vm946 = vcmask 1044484
        %v947 = vsel %vm946, %v937, %v945
        %vm948 = vcmask 1045509
        %v949 = vsel %vm948, %v937, %v947
        %vm950 = vcmask 1046534
        %v951 = vsel %vm950, %v937, %v949
        %vm952 = vcmask 1047559
        %v953 = vsel %vm952, %v937, %v951
        %v954 = vsel %vm942, %v941, %v941
        %v955 = vsel %vm944, %v941, %v954
        %v956 = vsel %vm946, %v941, %v955
        %v957 = vsel %vm948, %v941, %v956
        %v958 = vsel %vm950, %v941, %v957
        %v959 = vsel %vm952, %v941, %v958
        %v962 = vadd.f32 %v766, %v953
        %v963 = vadd.f32 %v769, %v959
        %v964 = vmul.f32 %v851, 2.0
        %v965 = vmul.f32 %v927, 2.0
        %v966 = vsub.f32 %v962, %v964
        %v967 = vsub.f32 %v963, %v965
        %v968 = vmax.f32 %v966, 0.0
        %v969 = vmax.f32 %v967, 0.0
        %v970 = vrsqrt.pop %v968
        %v971 = vmul.f32 %v968, %v970
        %vm972 = vcmp.eq.f32.partialorder %v968, inf
        %v973 = vsel %vm972, %v968, %v971
        %vm974 = vcmp.eq.f32.partialorder %v968, 0.0
        %v975 = vand.u32 %v968, 2147483648
        %v976 = vsel %vm974, %v975, %v973
        %v977 = vrsqrt.pop %v969
        %v978 = vmul.f32 %v969, %v977
        %vm979 = vcmp.eq.f32.partialorder %v969, inf
        %v980 = vsel %vm979, %v969, %v978
        %vm981 = vcmp.eq.f32.partialorder %v969, 0.0
        %v982 = vand.u32 %v969, 2147483648
        %v983 = vsel %vm981, %v982, %v980
        %v984 = vmul.f32 %v976, 0.35355338
        %v985 = vmul.f32 %v983, 0.35355338
        %v986 = vadd.f32 %v984, 1e-09
        %v987 = vadd.f32 %v985, 1e-09
        %v988 = vrcp.pop %v986
        %v989 = vmul.f32 1.0, %v988
        %v990 = vrcp.pop %v987
        %v991 = vmul.f32 1.0, %v990
        %v992 = vsel %vm763, %v989, -inf
        %993 = vmax.xlane.f32.xlu0 %v992
        %v994 = vpop.xlane.xlu0 %993
        %v995 = vsel %vm763, %v991, -inf
        %996 = vmax.xlane.f32.xlu0 %v995
        %v997 = vpop.xlane.xlu0 %996
        %v998 = vsub.f32 %v989, %v994
        %v999 = vsub.f32 %v991, %v997
        %v1000 = vmul.f32 %v998, 1.442695
        %v1001 = vpow.pop %v1000
        %v1002 = vmul.f32 %v999, 1.442695
        %v1003 = vpow.pop %v1002
        %v1004 = vsel %vm763, %v1001, 0.0
        %1005 = vadd.xlane.f32.xlu0 %v1004
        %v1006 = vpop.xlane.xlu0 %1005
        %v1007 = vsel %vm763, %v1003, 0.0
        %1008 = vadd.xlane.f32.xlu0 %v1007
        %v1009 = vpop.xlane.xlu0 %1008
        %v1010 = vrcp.pop %v1006
        %v1011 = vmul.f32 %v1001, %v1010
        %v1012 = vrcp.pop %v1009
        %v1013 = vmul.f32 %v1003, %v1012
        %v1015 = vsel %vm763, %v1011, 0
        %1017 = vmatprep.subr.mxu0 0.0
        %1018 = vmatpush1.msra.mxu0 %v753
        %1019 = vmatprep.subr.mxu0 0.0
        %1020 = vmatpush1.msra.mxu0 0.0
        %1021 = vmatprep.subr.mxu0 0.0
        %1022 = vmatpush1.msra.mxu0 0.0
        %1023 = vmatprep.subr.mxu0 0.0
        %1024 = vmatpush1.msra.mxu0 0.0
        %1025 = vmatprep.subr.mxu0 0.0
        %1026 = vmatpush1.msra.mxu0 0.0
        %1027 = vmatprep.subr.mxu0 0.0
        %1028 = vmatpush1.msra.mxu0 0.0
        %1029 = vmatprep.subr.mxu0 0.0
        %1030 = vmatpush1.msra.mxu0 0.0
        %1031 = vmatprep.subr.mxu0 0.0
        %1032 = vmatpush1.msra.mxu0 0.0
        %1033 = vmatprep.subr.mxu0 0.0
        %1034 = vmatpush1.msra.mxu0 0.0
        %1035 = vmatprep.subr.mxu0 0.0
        %1036 = vmatpush1.msra.mxu0 0.0
        %1037 = vmatprep.subr.mxu0 0.0
        %1038 = vmatpush1.msra.mxu0 0.0
        %1039 = vmatprep.subr.mxu0 0.0
        %1040 = vmatpush1.msra.mxu0 0.0
        %1041 = vmatprep.subr.mxu0 0.0
        %1042 = vmatpush1.msra.mxu0 0.0
        %1043 = vmatprep.subr.mxu0 0.0
        %1044 = vmatpush1.msra.mxu0 0.0
        %1045 = vmatprep.subr.mxu0 0.0
        %1046 = vmatpush1.msra.mxu0 0.0
        %1047 = vmatprep.subr.mxu0 0.0
        %1048 = vmatpush1.msra.mxu0 0.0
        %1049 = vmatprep.subr.mxu0 0.0
        %1050 = vmatpush1.msra.mxu0 0.0
        %1051 = vmatprep.subr.mxu0 0.0
        %1052 = vmatpush1.msra.mxu0 0.0
        %1053 = vmatprep.subr.mxu0 0.0
        %1054 = vmatpush1.msra.mxu0 0.0
        %1055 = vmatprep.subr.mxu0 0.0
        %1056 = vmatpush1.msra.mxu0 0.0
        %1057 = vmatprep.subr.mxu0 0.0
        %1058 = vmatpush1.msra.mxu0 0.0
        %1059 = vmatprep.subr.mxu0 0.0
        %1060 = vmatpush1.msra.mxu0 0.0
        %1061 = vmatprep.subr.mxu0 0.0
        %1062 = vmatpush1.msra.mxu0 0.0
        %1063 = vmatprep.subr.mxu0 0.0
        %1064 = vmatpush1.msra.mxu0 0.0
        %1065 = vmatprep.subr.mxu0 0.0
        %1066 = vmatpush1.msra.mxu0 0.0
        %1067 = vmatprep.subr.mxu0 0.0
        %1068 = vmatpush1.msra.mxu0 0.0
        %1069 = vmatprep.subr.mxu0 0.0
        %1070 = vmatpush1.msra.mxu0 0.0
        %1071 = vmatprep.subr.mxu0 0.0
        %1072 = vmatpush1.msra.mxu0 0.0
        %1073 = vmatprep.subr.mxu0 0.0
        %1074 = vmatpush1.msra.mxu0 0.0
        %1075 = vmatprep.subr.mxu0 0.0
        %1076 = vmatpush1.msra.mxu0 0.0
        %1077 = vmatprep.subr.mxu0 0.0
        %1078 = vmatpush1.msra.mxu0 0.0
        %1079 = vmatprep.subr.mxu0 0.0
        %1080 = vmatpush1.msra.mxu0 0.0
        %1081 = vmatprep.mubr.f32.mxu0 0.0
        %1082 = vmatmul.mubr.f32.gmra.mrb[0].mxu0 %v1015
        %v1083 = vpop.f32.mrb[0].mxu0
        %v1084 = vadd.f32 0.0, %v1083
        %v1085 = vpop.f32.mrb[0].mxu0
        %1086 = vdwg.mxu0
        %v1088 = vsel %vm763, %v1013, 0
        %1090 = vmatprep.subr.mxu0 0.0
        %1091 = vmatpush1.msra.mxu0 %v758
        %1092 = vmatprep.subr.mxu0 0.0
        %1093 = vmatpush1.msra.mxu0 0.0
        %1094 = vmatprep.subr.mxu0 0.0
        %1095 = vmatpush1.msra.mxu0 0.0
        %1096 = vmatprep.subr.mxu0 0.0
        %1097 = vmatpush1.msra.mxu0 0.0
        %1098 = vmatprep.subr.mxu0 0.0
        %1099 = vmatpush1.msra.mxu0 0.0
        %1100 = vmatprep.subr.mxu0 0.0
        %1101 = vmatpush1.msra.mxu0 0.0
        %1102 = vmatprep.subr.mxu0 0.0
        %1103 = vmatpush1.msra.mxu0 0.0
        %1104 = vmatprep.subr.mxu0 0.0
        %1105 = vmatpush1.msra.mxu0 0.0
        %1106 = vmatprep.subr.mxu0 0.0
        %1107 = vmatpush1.msra.mxu0 0.0
        %1108 = vmatprep.subr.mxu0 0.0
        %1109 = vmatpush1.msra.mxu0 0.0
        %1110 = vmatprep.subr.mxu0 0.0
        %1111 = vmatpush1.msra.mxu0 0.0
        %1112 = vmatprep.subr.mxu0 0.0
        %1113 = vmatpush1.msra.mxu0 0.0
        %1114 = vmatprep.subr.mxu0 0.0
        %1115 = vmatpush1.msra.mxu0 0.0
        %1116 = vmatprep.subr.mxu0 0.0
        %1117 = vmatpush1.msra.mxu0 0.0
        %1118 = vmatprep.subr.mxu0 0.0
        %1119 = vmatpush1.msra.mxu0 0.0
        %1120 = vmatprep.subr.mxu0 0.0
        %1121 = vmatpush1.msra.mxu0 0.0
        %1122 = vmatprep.subr.mxu0 0.0
        %1123 = vmatpush1.msra.mxu0 0.0
        %1124 = vmatprep.subr.mxu0 0.0
        %1125 = vmatpush1.msra.mxu0 0.0
        %1126 = vmatprep.subr.mxu0 0.0
        %1127 = vmatpush1.msra.mxu0 0.0
        %1128 = vmatprep.subr.mxu0 0.0
        %1129 = vmatpush1.msra.mxu0 0.0
        %1130 = vmatprep.subr.mxu0 0.0
        %1131 = vmatpush1.msra.mxu0 0.0
        %1132 = vmatprep.subr.mxu0 0.0
        %1133 = vmatpush1.msra.mxu0 0.0
        %1134 = vmatprep.subr.mxu0 0.0
        %1135 = vmatpush1.msra.mxu0 0.0
        %1136 = vmatprep.subr.mxu0 0.0
        %1137 = vmatpush1.msra.mxu0 0.0
        %1138 = vmatprep.subr.mxu0 0.0
        %1139 = vmatpush1.msra.mxu0 0.0
        %1140 = vmatprep.subr.mxu0 0.0
        %1141 = vmatpush1.msra.mxu0 0.0
        %1142 = vmatprep.subr.mxu0 0.0
        %1143 = vmatpush1.msra.mxu0 0.0
        %1144 = vmatprep.subr.mxu0 0.0
        %1145 = vmatpush1.msra.mxu0 0.0
        %1146 = vmatprep.subr.mxu0 0.0
        %1147 = vmatpush1.msra.mxu0 0.0
        %1148 = vmatprep.subr.mxu0 0.0
        %1149 = vmatpush1.msra.mxu0 0.0
        %1150 = vmatprep.subr.mxu0 0.0
        %1151 = vmatpush1.msra.mxu0 0.0
        %1152 = vmatprep.subr.mxu0 0.0
        %1153 = vmatpush1.msra.mxu0 0.0
        %1154 = vmatprep.mubr.f32.mxu0 0.0
        %1155 = vmatmul.mubr.f32.gmra.mrb[0].mxu0 %v1088
        %v1156 = vpop.f32.mrb[0].mxu0
        %v1157 = vadd.f32 0.0, %v1156
        %v1158 = vpop.f32.mrb[0].mxu0
        %1159 = vdwg.mxu0
        %1160 = vst.msk [vmem:[#allocation2] sm:$0xff] %vm763, %v1084
        %1161 = vst.msk [vmem:[#allocation2 + $0x8] sm:$0xff] %vm763, %v1157
        %1164 = vrot.lane.b32.xlu0 %v761, 120
        %v1165 = vpop.permute.xlu0 %1164
        %1166 = vrot.lane.b32.xlu0 %v762, 120
        %v1167 = vpop.permute.xlu0 %1166
        %v1170 = vsel %vm763, %v1165, 0.0
        %1171 = vadd.xlane.f32.xlu0 %v1170
        %v1172 = vpop.xlane.xlu0 %1171
        %v1173 = vsel %vm763, %v1167, 0.0
        %1174 = vadd.xlane.f32.xlu0 %v1173
        %v1175 = vpop.xlane.xlu0 %1174
        %1178 = vrot.lane.b32.xlu0 %v770, 120
        %v1179 = vpop.permute.xlu0 %1178
        %1180 = vrot.lane.b32.xlu0 %v771, 120
        %v1181 = vpop.permute.xlu0 %1180
        %v1184 = vsel %vm763, %v1179, 0.0
        %1185 = vadd.xlane.f32.xlu0 %v1184
        %v1186 = vpop.xlane.xlu0 %1185
        %v1187 = vsel %vm763, %v1181, 0.0
        %1188 = vadd.xlane.f32.xlu0 %v1187
        %v1189 = vpop.xlane.xlu0 %1188
        %1190 = vrot.lane.b32.xlu0 %v559, 120
        %v1191 = vpop.permute.xlu0 %1190
        %1192 = vrot.lane.b32.xlu0 %v656, 120
        %v1193 = vpop.permute.xlu0 %1192
        %v1194 = vsel %vm763, %v1191, 0
        %v1196 = vsel %vm763, %v1193, 0
        %1198 = vmatprep.subr.mxu0 0.0
        %1199 = vmatpush1.xpose.msra.mxu0 %v1196
        %1200 = vmatprep.subr.mxu0 0.0
        %1201 = vmatpush1.xpose.msra.mxu0 0.0
        %1202 = vmatprep.subr.mxu0 0.0
        %1203 = vmatpush1.xpose.msra.mxu0 0.0
        %1204 = vmatprep.subr.mxu0 0.0
        %1205 = vmatpush1.xpose.msra.mxu0 0.0
        %1206 = vmatprep.subr.mxu0 0.0
        %1207 = vmatpush1.xpose.msra.mxu0 0.0
        %1208 = vmatprep.subr.mxu0 0.0
        %1209 = vmatpush1.xpose.msra.mxu0 0.0
        %1210 = vmatprep.subr.mxu0 0.0
        %1211 = vmatpush1.xpose.msra.mxu0 0.0
        %1212 = vmatprep.subr.mxu0 0.0
        %1213 = vmatpush1.xpose.msra.mxu0 0.0
        %1214 = vmatprep.subr.mxu0 0.0
        %1215 = vmatpush1.xpose.msra.mxu0 0.0
        %1216 = vmatprep.subr.mxu0 0.0
        %1217 = vmatpush1.xpose.msra.mxu0 0.0
        %1218 = vmatprep.subr.mxu0 0.0
        %1219 = vmatpush1.xpose.msra.mxu0 0.0
        %1220 = vmatprep.subr.mxu0 0.0
        %1221 = vmatpush1.xpose.msra.mxu0 0.0
        %1222 = vmatprep.subr.mxu0 0.0
        %1223 = vmatpush1.xpose.msra.mxu0 0.0
        %1224 = vmatprep.subr.mxu0 0.0
        %1225 = vmatpush1.xpose.msra.mxu0 0.0
        %1226 = vmatprep.subr.mxu0 0.0
        %1227 = vmatpush1.xpose.msra.mxu0 0.0
        %1228 = vmatprep.subr.mxu0 0.0
        %1229 = vmatpush1.xpose.msra.mxu0 0.0
        %1230 = vmatprep.subr.mxu0 0.0
        %1231 = vmatpush1.xpose.msra.mxu0 0.0
        %1232 = vmatprep.subr.mxu0 0.0
        %1233 = vmatpush1.xpose.msra.mxu0 0.0
        %1234 = vmatprep.subr.mxu0 0.0
        %1235 = vmatpush1.xpose.msra.mxu0 0.0
        %1236 = vmatprep.subr.mxu0 0.0
        %1237 = vmatpush1.xpose.msra.mxu0 0.0
        %1238 = vmatprep.subr.mxu0 0.0
        %1239 = vmatpush1.xpose.msra.mxu0 0.0
        %1240 = vmatprep.subr.mxu0 0.0
        %1241 = vmatpush1.xpose.msra.mxu0 0.0
        %1242 = vmatprep.subr.mxu0 0.0
        %1243 = vmatpush1.xpose.msra.mxu0 0.0
        %1244 = vmatprep.subr.mxu0 0.0
        %1245 = vmatpush1.xpose.msra.mxu0 0.0
        %1246 = vmatprep.subr.mxu0 0.0
        %1247 = vmatpush1.xpose.msra.mxu0 0.0
        %1248 = vmatprep.subr.mxu0 0.0
        %1249 = vmatpush1.xpose.msra.mxu0 0.0
        %1250 = vmatprep.subr.mxu0 0.0
        %1251 = vmatpush1.xpose.msra.mxu0 0.0
        %1252 = vmatprep.subr.mxu0 0.0
        %1253 = vmatpush1.xpose.msra.mxu0 0.0
        %1254 = vmatprep.subr.mxu0 0.0
        %1255 = vmatpush1.xpose.msra.mxu0 0.0
        %1256 = vmatprep.subr.mxu0 0.0
        %1257 = vmatpush1.xpose.msra.mxu0 0.0
        %1258 = vmatprep.subr.mxu0 0.0
        %1259 = vmatpush1.xpose.msra.mxu0 0.0
        %1260 = vmatprep.subr.mxu0 0.0
        %1261 = vmatpush1.xpose.msra.mxu0 0.0
        %1262 = vmatprep.mubr.f32.mxu0 0.0
        %1263 = vmatmul.mubr.f32.gmra.mrb[0].mxu0 %v1194
        %v1264 = vpop.f32.mrb[0].mxu0
        %v1265 = vadd.f32 0.0, %v1264
        %v1266 = vpop.f32.mrb[0].mxu0
        %1267 = vdwg.mxu0
        %1268 = vrot.lane.b32.xlu0 %v564, 120
        %v1269 = vpop.permute.xlu0 %1268
        %1270 = vrot.lane.b32.xlu0 %v661, 120
        %v1271 = vpop.permute.xlu0 %1270
        %v1272 = vsel %vm763, %v1269, 0
        %v1274 = vsel %vm763, %v1271, 0
        %1276 = vmatprep.subr.mxu0 0.0
        %1277 = vmatpush1.xpose.msra.mxu0 %v1274
        %1278 = vmatprep.subr.mxu0 0.0
        %1279 = vmatpush1.xpose.msra.mxu0 0.0
        %1280 = vmatprep.subr.mxu0 0.0
        %1281 = vmatpush1.xpose.msra.mxu0 0.0
        %1282 = vmatprep.subr.mxu0 0.0
        %1283 = vmatpush1.xpose.msra.mxu0 0.0
        %1284 = vmatprep.subr.mxu0 0.0
        %1285 = vmatpush1.xpose.msra.mxu0 0.0
        %1286 = vmatprep.subr.mxu0 0.0
        %1287 = vmatpush1.xpose.msra.mxu0 0.0
        %1288 = vmatprep.subr.mxu0 0.0
        %1289 = vmatpush1.xpose.msra.mxu0 0.0
        %1290 = vmatprep.subr.mxu0 0.0
        %1291 = vmatpush1.xpose.msra.mxu0 0.0
        %1292 = vmatprep.subr.mxu0 0.0
        %1293 = vmatpush1.xpose.msra.mxu0 0.0
        %1294 = vmatprep.subr.mxu0 0.0
        %1295 = vmatpush1.xpose.msra.mxu0 0.0
        %1296 = vmatprep.subr.mxu0 0.0
        %1297 = vmatpush1.xpose.msra.mxu0 0.0
        %1298 = vmatprep.subr.mxu0 0.0
        %1299 = vmatpush1.xpose.msra.mxu0 0.0
        %1300 = vmatprep.subr.mxu0 0.0
        %1301 = vmatpush1.xpose.msra.mxu0 0.0
        %1302 = vmatprep.subr.mxu0 0.0
        %1303 = vmatpush1.xpose.msra.mxu0 0.0
        %1304 = vmatprep.subr.mxu0 0.0
        %1305 = vmatpush1.xpose.msra.mxu0 0.0
        %1306 = vmatprep.subr.mxu0 0.0
        %1307 = vmatpush1.xpose.msra.mxu0 0.0
        %1308 = vmatprep.subr.mxu0 0.0
        %1309 = vmatpush1.xpose.msra.mxu0 0.0
        %1310 = vmatprep.subr.mxu0 0.0
        %1311 = vmatpush1.xpose.msra.mxu0 0.0
        %1312 = vmatprep.subr.mxu0 0.0
        %1313 = vmatpush1.xpose.msra.mxu0 0.0
        %1314 = vmatprep.subr.mxu0 0.0
        %1315 = vmatpush1.xpose.msra.mxu0 0.0
        %1316 = vmatprep.subr.mxu0 0.0
        %1317 = vmatpush1.xpose.msra.mxu0 0.0
        %1318 = vmatprep.subr.mxu0 0.0
        %1319 = vmatpush1.xpose.msra.mxu0 0.0
        %1320 = vmatprep.subr.mxu0 0.0
        %1321 = vmatpush1.xpose.msra.mxu0 0.0
        %1322 = vmatprep.subr.mxu0 0.0
        %1323 = vmatpush1.xpose.msra.mxu0 0.0
        %1324 = vmatprep.subr.mxu0 0.0
        %1325 = vmatpush1.xpose.msra.mxu0 0.0
        %1326 = vmatprep.subr.mxu0 0.0
        %1327 = vmatpush1.xpose.msra.mxu0 0.0
        %1328 = vmatprep.subr.mxu0 0.0
        %1329 = vmatpush1.xpose.msra.mxu0 0.0
        %1330 = vmatprep.subr.mxu0 0.0
        %1331 = vmatpush1.xpose.msra.mxu0 0.0
        %1332 = vmatprep.subr.mxu0 0.0
        %1333 = vmatpush1.xpose.msra.mxu0 0.0
        %1334 = vmatprep.subr.mxu0 0.0
        %1335 = vmatpush1.xpose.msra.mxu0 0.0
        %1336 = vmatprep.subr.mxu0 0.0
        %1337 = vmatpush1.xpose.msra.mxu0 0.0
        %1338 = vmatprep.subr.mxu0 0.0
        %1339 = vmatpush1.xpose.msra.mxu0 0.0
        %1340 = vmatprep.mubr.f32.mxu0 0.0
        %1341 = vmatmul.mubr.f32.gmra.mrb[0].mxu0 %v1272
        %v1342 = vpop.f32.mrb[0].mxu0
        %v1343 = vadd.f32 0.0, %v1342
        %v1344 = vpop.f32.mrb[0].mxu0
        %1345 = vdwg.mxu0
        %v1348 = vlaneseq
        %v1349 = vshrl.u32 %v1348, 7
        %v1350 = vsub.s32 %v933, %v1349
        %v1351 = vrot.slane %v1186, %v1350
        %v1352 = vlaneseq
        %v1353 = vshrl.u32 %v1352, 7
        %v1354 = vsub.s32 %v933, %v1353
        %v1355 = vrot.slane %v1189, %v1354
        %v1356 = vsel %vm942, %v1351, %v1351
        %v1357 = vsel %vm944, %v1351, %v1356
        %v1358 = vsel %vm946, %v1351, %v1357
        %v1359 = vsel %vm948, %v1351, %v1358
        %v1360 = vsel %vm950, %v1351, %v1359
        %v1361 = vsel %vm952, %v1351, %v1360
        %v1362 = vsel %vm942, %v1355, %v1355
        %v1363 = vsel %vm944, %v1355, %v1362
        %v1364 = vsel %vm946, %v1355, %v1363
        %v1365 = vsel %vm948, %v1355, %v1364
        %v1366 = vsel %vm950, %v1355, %v1365
        %v1367 = vsel %vm952, %v1355, %v1366
        %v1370 = vadd.f32 %v1172, %v1361
        %v1371 = vadd.f32 %v1175, %v1367
        %v1372 = vmul.f32 %v1265, 2.0
        %v1373 = vmul.f32 %v1343, 2.0
        %v1374 = vsub.f32 %v1370, %v1372
        %v1375 = vsub.f32 %v1371, %v1373
        %v1376 = vmax.f32 %v1374, 0.0
        %v1377 = vmax.f32 %v1375, 0.0
        %v1378 = vrsqrt.pop %v1376
        %v1379 = vmul.f32 %v1376, %v1378
        %vm1380 = vcmp.eq.f32.partialorder %v1376, inf
        %v1381 = vsel %vm1380, %v1376, %v1379
        %vm1382 = vcmp.eq.f32.partialorder %v1376, 0.0
        %v1383 = vand.u32 %v1376, 2147483648
        %v1384 = vsel %vm1382, %v1383, %v1381
        %v1385 = vrsqrt.pop %v1377
        %v1386 = vmul.f32 %v1377, %v1385
        %vm1387 = vcmp.eq.f32.partialorder %v1377, inf
        %v1388 = vsel %vm1387, %v1377, %v1386
        %vm1389 = vcmp.eq.f32.partialorder %v1377, 0.0
        %v1390 = vand.u32 %v1377, 2147483648
        %v1391 = vsel %vm1389, %v1390, %v1388
        %v1392 = vmul.f32 %v1384, 0.35355338
        %v1393 = vmul.f32 %v1391, 0.35355338
        %v1394 = vadd.f32 %v1392, 1e-09
        %v1395 = vadd.f32 %v1393, 1e-09
        %v1396 = vrcp.pop %v1394
        %v1397 = vmul.f32 1.0, %v1396
        %v1398 = vrcp.pop %v1395
        %v1399 = vmul.f32 1.0, %v1398
        %v1400 = vsel %vm763, %v1397, -inf
        %1401 = vmax.xlane.f32.xlu0 %v1400
        %v1402 = vpop.xlane.xlu0 %1401
        %v1403 = vsel %vm763, %v1399, -inf
        %1404 = vmax.xlane.f32.xlu0 %v1403
        %v1405 = vpop.xlane.xlu0 %1404
        %v1406 = vsub.f32 %v1397, %v1402
        %v1407 = vsub.f32 %v1399, %v1405
        %v1408 = vmul.f32 %v1406, 1.442695
        %v1409 = vpow.pop %v1408
        %v1410 = vmul.f32 %v1407, 1.442695
        %v1411 = vpow.pop %v1410
        %v1412 = vsel %vm763, %v1409, 0.0
        %1413 = vadd.xlane.f32.xlu0 %v1412
        %v1414 = vpop.xlane.xlu0 %1413
        %v1415 = vsel %vm763, %v1411, 0.0
        %1416 = vadd.xlane.f32.xlu0 %v1415
        %v1417 = vpop.xlane.xlu0 %1416
        %v1418 = vrcp.pop %v1414
        %v1419 = vmul.f32 %v1409, %v1418
        %v1420 = vrcp.pop %v1417
        %v1421 = vmul.f32 %v1411, %v1420
        %1423 = vrot.lane.b32.xlu0 %v753, 120
        %v1424 = vpop.permute.xlu0 %1423
        %v1427 = vsel %vm763, %v1419, 0
        %1429 = vmatprep.subr.mxu0 0.0
        %1430 = vmatpush1.msra.mxu0 %v1424
        %1431 = vmatprep.subr.mxu0 0.0
        %1432 = vmatpush1.msra.mxu0 0.0
        %1433 = vmatprep.subr.mxu0 0.0
        %1434 = vmatpush1.msra.mxu0 0.0
        %1435 = vmatprep.subr.mxu0 0.0
        %1436 = vmatpush1.msra.mxu0 0.0
        %1437 = vmatprep.subr.mxu0 0.0
        %1438 = vmatpush1.msra.mxu0 0.0
        %1439 = vmatprep.subr.mxu0 0.0
        %1440 = vmatpush1.msra.mxu0 0.0
        %1441 = vmatprep.subr.mxu0 0.0
        %1442 = vmatpush1.msra.mxu0 0.0
        %1443 = vmatprep.subr.mxu0 0.0
        %1444 = vmatpush1.msra.mxu0 0.0
        %1445 = vmatprep.subr.mxu0 0.0
        %1446 = vmatpush1.msra.mxu0 0.0
        %1447 = vmatprep.subr.mxu0 0.0
        %1448 = vmatpush1.msra.mxu0 0.0
        %1449 = vmatprep.subr.mxu0 0.0
        %1450 = vmatpush1.msra.mxu0 0.0
        %1451 = vmatprep.subr.mxu0 0.0
        %1452 = vmatpush1.msra.mxu0 0.0
        %1453 = vmatprep.subr.mxu0 0.0
        %1454 = vmatpush1.msra.mxu0 0.0
        %1455 = vmatprep.subr.mxu0 0.0
        %1456 = vmatpush1.msra.mxu0 0.0
        %1457 = vmatprep.subr.mxu0 0.0
        %1458 = vmatpush1.msra.mxu0 0.0
        %1459 = vmatprep.subr.mxu0 0.0
        %1460 = vmatpush1.msra.mxu0 0.0
        %1461 = vmatprep.subr.mxu0 0.0
        %1462 = vmatpush1.msra.mxu0 0.0
        %1463 = vmatprep.subr.mxu0 0.0
        %1464 = vmatpush1.msra.mxu0 0.0
        %1465 = vmatprep.subr.mxu0 0.0
        %1466 = vmatpush1.msra.mxu0 0.0
        %1467 = vmatprep.subr.mxu0 0.0
        %1468 = vmatpush1.msra.mxu0 0.0
        %1469 = vmatprep.subr.mxu0 0.0
        %1470 = vmatpush1.msra.mxu0 0.0
        %1471 = vmatprep.subr.mxu0 0.0
        %1472 = vmatpush1.msra.mxu0 0.0
        %1473 = vmatprep.subr.mxu0 0.0
        %1474 = vmatpush1.msra.mxu0 0.0
        %1475 = vmatprep.subr.mxu0 0.0
        %1476 = vmatpush1.msra.mxu0 0.0
        %1477 = vmatprep.subr.mxu0 0.0
        %1478 = vmatpush1.msra.mxu0 0.0
        %1479 = vmatprep.subr.mxu0 0.0
        %1480 = vmatpush1.msra.mxu0 0.0
        %1481 = vmatprep.subr.mxu0 0.0
        %1482 = vmatpush1.msra.mxu0 0.0
        %1483 = vmatprep.subr.mxu0 0.0
        %1484 = vmatpush1.msra.mxu0 0.0
        %1485 = vmatprep.subr.mxu0 0.0
        %1486 = vmatpush1.msra.mxu0 0.0
        %1487 = vmatprep.subr.mxu0 0.0
        %1488 = vmatpush1.msra.mxu0 0.0
        %1489 = vmatprep.subr.mxu0 0.0
        %1490 = vmatpush1.msra.mxu0 0.0
        %1491 = vmatprep.subr.mxu0 0.0
        %1492 = vmatpush1.msra.mxu0 0.0
        %1493 = vmatprep.mubr.f32.mxu0 0.0
        %1494 = vmatmul.mubr.f32.gmra.mrb[0].mxu0 %v1427
        %v1495 = vpop.f32.mrb[0].mxu0
        %v1496 = vadd.f32 0.0, %v1495
        %v1497 = vpop.f32.mrb[0].mxu0
        %1498 = vdwg.mxu0
        %1500 = vrot.lane.b32.xlu0 %v758, 120
        %v1501 = vpop.permute.xlu0 %1500
        %v1504 = vsel %vm763, %v1421, 0
        %1506 = vmatprep.subr.mxu0 0.0
        %1507 = vmatpush1.msra.mxu0 %v1501
        %1508 = vmatprep.subr.mxu0 0.0
        %1509 = vmatpush1.msra.mxu0 0.0
        %1510 = vmatprep.subr.mxu0 0.0
        %1511 = vmatpush1.msra.mxu0 0.0
        %1512 = vmatprep.subr.mxu0 0.0
        %1513 = vmatpush1.msra.mxu0 0.0
        %1514 = vmatprep.subr.mxu0 0.0
        %1515 = vmatpush1.msra.mxu0 0.0
        %1516 = vmatprep.subr.mxu0 0.0
        %1517 = vmatpush1.msra.mxu0 0.0
        %1518 = vmatprep.subr.mxu0 0.0
        %1519 = vmatpush1.msra.mxu0 0.0
        %1520 = vmatprep.subr.mxu0 0.0
        %1521 = vmatpush1.msra.mxu0 0.0
        %1522 = vmatprep.subr.mxu0 0.0
        %1523 = vmatpush1.msra.mxu0 0.0
        %1524 = vmatprep.subr.mxu0 0.0
        %1525 = vmatpush1.msra.mxu0 0.0
        %1526 = vmatprep.subr.mxu0 0.0
        %1527 = vmatpush1.msra.mxu0 0.0
        %1528 = vmatprep.subr.mxu0 0.0
        %1529 = vmatpush1.msra.mxu0 0.0
        %1530 = vmatprep.subr.mxu0 0.0
        %1531 = vmatpush1.msra.mxu0 0.0
        %1532 = vmatprep.subr.mxu0 0.0
        %1533 = vmatpush1.msra.mxu0 0.0
        %1534 = vmatprep.subr.mxu0 0.0
        %1535 = vmatpush1.msra.mxu0 0.0
        %1536 = vmatprep.subr.mxu0 0.0
        %1537 = vmatpush1.msra.mxu0 0.0
        %1538 = vmatprep.subr.mxu0 0.0
        %1539 = vmatpush1.msra.mxu0 0.0
        %1540 = vmatprep.subr.mxu0 0.0
        %1541 = vmatpush1.msra.mxu0 0.0
        %1542 = vmatprep.subr.mxu0 0.0
        %1543 = vmatpush1.msra.mxu0 0.0
        %1544 = vmatprep.subr.mxu0 0.0
        %1545 = vmatpush1.msra.mxu0 0.0
        %1546 = vmatprep.subr.mxu0 0.0
        %1547 = vmatpush1.msra.mxu0 0.0
        %1548 = vmatprep.subr.mxu0 0.0
        %1549 = vmatpush1.msra.mxu0 0.0
        %1550 = vmatprep.subr.mxu0 0.0
        %1551 = vmatpush1.msra.mxu0 0.0
        %1552 = vmatprep.subr.mxu0 0.0
        %1553 = vmatpush1.msra.mxu0 0.0
        %1554 = vmatprep.subr.mxu0 0.0
        %1555 = vmatpush1.msra.mxu0 0.0
        %1556 = vmatprep.subr.mxu0 0.0
        %1557 = vmatpush1.msra.mxu0 0.0
        %1558 = vmatprep.subr.mxu0 0.0
        %1559 = vmatpush1.msra.mxu0 0.0
        %1560 = vmatprep.subr.mxu0 0.0
        %1561 = vmatpush1.msra.mxu0 0.0
        %1562 = vmatprep.subr.mxu0 0.0
        %1563 = vmatpush1.msra.mxu0 0.0
        %1564 = vmatprep.subr.mxu0 0.0
        %1565 = vmatpush1.msra.mxu0 0.0
        %1566 = vmatprep.subr.mxu0 0.0
        %1567 = vmatpush1.msra.mxu0 0.0
        %1568 = vmatprep.subr.mxu0 0.0
        %1569 = vmatpush1.msra.mxu0 0.0
        %1570 = vmatprep.mubr.f32.mxu0 0.0
        %1571 = vmatmul.mubr.f32.gmra.mrb[0].mxu0 %v1504
        %v1572 = vpop.f32.mrb[0].mxu0
        %v1573 = vadd.f32 0.0, %v1572
        %v1574 = vpop.f32.mrb[0].mxu0
        %1575 = vdwg.mxu0
        %1578 = vrot.lane.b32.xlu0 %v1496, 8
        %v1579 = vpop.permute.xlu0 %1578
        %1580 = vrot.lane.b32.xlu0 %v1573, 8
        %v1581 = vpop.permute.xlu0 %1580
        %vm1584 = vcmask 130112
        %1585 = vst.msk [vmem:[#allocation2] sm:$0xff] %vm1584, %v1579
        %1586 = vst.msk [vmem:[#allocation2 + $0x8] sm:$0xff] %vm1584, %v1581
        %1587 = vrot.lane.b32.xlu0 %v761, 112
        %v1588 = vpop.permute.xlu0 %1587
        %1589 = vrot.lane.b32.xlu0 %v762, 112
        %v1590 = vpop.permute.xlu0 %1589
        %v1593 = vsel %vm763, %v1588, 0.0
        %1594 = vadd.xlane.f32.xlu0 %v1593
        %v1595 = vpop.xlane.xlu0 %1594
        %v1596 = vsel %vm763, %v1590, 0.0
        %1597 = vadd.xlane.f32.xlu0 %v1596
        %v1598 = vpop.xlane.xlu0 %1597
        %1599 = vrot.lane.b32.xlu0 %v770, 112
        %v1600 = vpop.permute.xlu0 %1599
        %1601 = vrot.lane.b32.xlu0 %v771, 112
        %v1602 = vpop.permute.xlu0 %1601
        %v1605 = vsel %vm763, %v1600, 0.0
        %1606 = vadd.xlane.f32.xlu0 %v1605
        %v1607 = vpop.xlane.xlu0 %1606
        %v1608 = vsel %vm763, %v1602, 0.0
        %1609 = vadd.xlane.f32.xlu0 %v1608
        %v1610 = vpop.xlane.xlu0 %1609
        %1611 = vrot.lane.b32.xlu0 %v559, 112
        %v1612 = vpop.permute.xlu0 %1611
        %1613 = vrot.lane.b32.xlu0 %v656, 112
        %v1614 = vpop.permute.xlu0 %1613
        %v1615 = vsel %vm763, %v1612, 0
        %v1617 = vsel %vm763, %v1614, 0
        %1619 = vmatprep.subr.mxu0 0.0
        %1620 = vmatpush1.xpose.msra.mxu0 %v1617
        %1621 = vmatprep.subr.mxu0 0.0
        %1622 = vmatpush1.xpose.msra.mxu0 0.0
        %1623 = vmatprep.subr.mxu0 0.0
        %1624 = vmatpush1.xpose.msra.mxu0 0.0
        %1625 = vmatprep.subr.mxu0 0.0
        %1626 = vmatpush1.xpose.msra.mxu0 0.0
        %1627 = vmatprep.subr.mxu0 0.0
        %1628 = vmatpush1.xpose.msra.mxu0 0.0
        %1629 = vmatprep.subr.mxu0 0.0
        %1630 = vmatpush1.xpose.msra.mxu0 0.0
        %1631 = vmatprep.subr.mxu0 0.0
        %1632 = vmatpush1.xpose.msra.mxu0 0.0
        %1633 = vmatprep.subr.mxu0 0.0
        %1634 = vmatpush1.xpose.msra.mxu0 0.0
        %1635 = vmatprep.subr.mxu0 0.0
        %1636 = vmatpush1.xpose.msra.mxu0 0.0
        %1637 = vmatprep.subr.mxu0 0.0
        %1638 = vmatpush1.xpose.msra.mxu0 0.0
        %1639 = vmatprep.subr.mxu0 0.0
        %1640 = vmatpush1.xpose.msra.mxu0 0.0
        %1641 = vmatprep.subr.mxu0 0.0
        %1642 = vmatpush1.xpose.msra.mxu0 0.0
        %1643 = vmatprep.subr.mxu0 0.0
        %1644 = vmatpush1.xpose.msra.mxu0 0.0
        %1645 = vmatprep.subr.mxu0 0.0
        %1646 = vmatpush1.xpose.msra.mxu0 0.0
        %1647 = vmatprep.subr.mxu0 0.0
        %1648 = vmatpush1.xpose.msra.mxu0 0.0
        %1649 = vmatprep.subr.mxu0 0.0
        %1650 = vmatpush1.xpose.msra.mxu0 0.0
        %1651 = vmatprep.subr.mxu0 0.0
        %1652 = vmatpush1.xpose.msra.mxu0 0.0
        %1653 = vmatprep.subr.mxu0 0.0
        %1654 = vmatpush1.xpose.msra.mxu0 0.0
        %1655 = vmatprep.subr.mxu0 0.0
        %1656 = vmatpush1.xpose.msra.mxu0 0.0
        %1657 = vmatprep.subr.mxu0 0.0
        %1658 = vmatpush1.xpose.msra.mxu0 0.0
        %1659 = vmatprep.subr.mxu0 0.0
        %1660 = vmatpush1.xpose.msra.mxu0 0.0
        %1661 = vmatprep.subr.mxu0 0.0
        %1662 = vmatpush1.xpose.msra.mxu0 0.0
        %1663 = vmatprep.subr.mxu0 0.0
        %1664 = vmatpush1.xpose.msra.mxu0 0.0
        %1665 = vmatprep.subr.mxu0 0.0
        %1666 = vmatpush1.xpose.msra.mxu0 0.0
        %1667 = vmatprep.subr.mxu0 0.0
        %1668 = vmatpush1.xpose.msra.mxu0 0.0
        %1669 = vmatprep.subr.mxu0 0.0
        %1670 = vmatpush1.xpose.msra.mxu0 0.0
        %1671 = vmatprep.subr.mxu0 0.0
        %1672 = vmatpush1.xpose.msra.mxu0 0.0
        %1673 = vmatprep.subr.mxu0 0.0
        %1674 = vmatpush1.xpose.msra.mxu0 0.0
        %1675 = vmatprep.subr.mxu0 0.0
        %1676 = vmatpush1.xpose.msra.mxu0 0.0
        %1677 = vmatprep.subr.mxu0 0.0
        %1678 = vmatpush1.xpose.msra.mxu0 0.0
        %1679 = vmatprep.subr.mxu0 0.0
        %1680 = vmatpush1.xpose.msra.mxu0 0.0
        %1681 = vmatprep.subr.mxu0 0.0
        %1682 = vmatpush1.xpose.msra.mxu0 0.0
        %1683 = vmatprep.mubr.f32.mxu0 0.0
        %1684 = vmatmul.mubr.f32.gmra.mrb[0].mxu0 %v1615
        %v1685 = vpop.f32.mrb[0].mxu0
        %v1686 = vadd.f32 0.0, %v1685
        %v1687 = vpop.f32.mrb[0].mxu0
        %1688 = vdwg.mxu0
        %1689 = vrot.lane.b32.xlu0 %v564, 112
        %v1690 = vpop.permute.xlu0 %1689
        %1691 = vrot.lane.b32.xlu0 %v661, 112
        %v1692 = vpop.permute.xlu0 %1691
        %v1693 = vsel %vm763, %v1690, 0
        %v1695 = vsel %vm763, %v1692, 0
        %1697 = vmatprep.subr.mxu0 0.0
        %1698 = vmatpush1.xpose.msra.mxu0 %v1695
        %1699 = vmatprep.subr.mxu0 0.0
        %1700 = vmatpush1.xpose.msra.mxu0 0.0
        %1701 = vmatprep.subr.mxu0 0.0
        %1702 = vmatpush1.xpose.msra.mxu0 0.0
        %1703 = vmatprep.subr.mxu0 0.0
        %1704 = vmatpush1.xpose.msra.mxu0 0.0
        %1705 = vmatprep.subr.mxu0 0.0
        %1706 = vmatpush1.xpose.msra.mxu0 0.0
        %1707 = vmatprep.subr.mxu0 0.0
        %1708 = vmatpush1.xpose.msra.mxu0 0.0
        %1709 = vmatprep.subr.mxu0 0.0
        %1710 = vmatpush1.xpose.msra.mxu0 0.0
        %1711 = vmatprep.subr.mxu0 0.0
        %1712 = vmatpush1.xpose.msra.mxu0 0.0
        %1713 = vmatprep.subr.mxu0 0.0
        %1714 = vmatpush1.xpose.msra.mxu0 0.0
        %1715 = vmatprep.subr.mxu0 0.0
        %1716 = vmatpush1.xpose.msra.mxu0 0.0
        %1717 = vmatprep.subr.mxu0 0.0
        %1718 = vmatpush1.xpose.msra.mxu0 0.0
        %1719 = vmatprep.subr.mxu0 0.0
        %1720 = vmatpush1.xpose.msra.mxu0 0.0
        %1721 = vmatprep.subr.mxu0 0.0
        %1722 = vmatpush1.xpose.msra.mxu0 0.0
        %1723 = vmatprep.subr.mxu0 0.0
        %1724 = vmatpush1.xpose.msra.mxu0 0.0
        %1725 = vmatprep.subr.mxu0 0.0
        %1726 = vmatpush1.xpose.msra.mxu0 0.0
        %1727 = vmatprep.subr.mxu0 0.0
        %1728 = vmatpush1.xpose.msra.mxu0 0.0
        %1729 = vmatprep.subr.mxu0 0.0
        %1730 = vmatpush1.xpose.msra.mxu0 0.0
        %1731 = vmatprep.subr.mxu0 0.0
        %1732 = vmatpush1.xpose.msra.mxu0 0.0
        %1733 = vmatprep.subr.mxu0 0.0
        %1734 = vmatpush1.xpose.msra.mxu0 0.0
        %1735 = vmatprep.subr.mxu0 0.0
        %1736 = vmatpush1.xpose.msra.mxu0 0.0
        %1737 = vmatprep.subr.mxu0 0.0
        %1738 = vmatpush1.xpose.msra.mxu0 0.0
        %1739 = vmatprep.subr.mxu0 0.0
        %1740 = vmatpush1.xpose.msra.mxu0 0.0
        %1741 = vmatprep.subr.mxu0 0.0
        %1742 = vmatpush1.xpose.msra.mxu0 0.0
        %1743 = vmatprep.subr.mxu0 0.0
        %1744 = vmatpush1.xpose.msra.mxu0 0.0
        %1745 = vmatprep.subr.mxu0 0.0
        %1746 = vmatpush1.xpose.msra.mxu0 0.0
        %1747 = vmatprep.subr.mxu0 0.0
        %1748 = vmatpush1.xpose.msra.mxu0 0.0
        %1749 = vmatprep.subr.mxu0 0.0
        %1750 = vmatpush1.xpose.msra.mxu0 0.0
        %1751 = vmatprep.subr.mxu0 0.0
        %1752 = vmatpush1.xpose.msra.mxu0 0.0
        %1753 = vmatprep.subr.mxu0 0.0
        %1754 = vmatpush1.xpose.msra.mxu0 0.0
        %1755 = vmatprep.subr.mxu0 0.0
        %1756 = vmatpush1.xpose.msra.mxu0 0.0
        %1757 = vmatprep.subr.mxu0 0.0
        %1758 = vmatpush1.xpose.msra.mxu0 0.0
        %1759 = vmatprep.subr.mxu0 0.0
        %1760 = vmatpush1.xpose.msra.mxu0 0.0
        %1761 = vmatprep.mubr.f32.mxu0 0.0
        %1762 = vmatmul.mubr.f32.gmra.mrb[0].mxu0 %v1693
        %v1763 = vpop.f32.mrb[0].mxu0
        %v1764 = vadd.f32 0.0, %v1763
        %v1765 = vpop.f32.mrb[0].mxu0
        %1766 = vdwg.mxu0
        %v1769 = vlaneseq
        %v1770 = vshrl.u32 %v1769, 7
        %v1771 = vsub.s32 %v933, %v1770
        %v1772 = vrot.slane %v1607, %v1771
        %v1773 = vlaneseq
        %v1774 = vshrl.u32 %v1773, 7
        %v1775 = vsub.s32 %v933, %v1774
        %v1776 = vrot.slane %v1610, %v1775
        %v1777 = vsel %vm942, %v1772, %v1772
        %v1778 = vsel %vm944, %v1772, %v1777
        %v1779 = vsel %vm946, %v1772, %v1778
        %v1780 = vsel %vm948, %v1772, %v1779
        %v1781 = vsel %vm950, %v1772, %v1780
        %v1782 = vsel %vm952, %v1772, %v1781
        %v1783 = vsel %vm942, %v1776, %v1776
        %v1784 = vsel %vm944, %v1776, %v1783
        %v1785 = vsel %vm946, %v1776, %v1784
        %v1786 = vsel %vm948, %v1776, %v1785
        %v1787 = vsel %vm950, %v1776, %v1786
        %v1788 = vsel %vm952, %v1776, %v1787
        %v1791 = vadd.f32 %v1595, %v1782
        %v1792 = vadd.f32 %v1598, %v1788
        %v1793 = vmul.f32 %v1686, 2.0
        %v1794 = vmul.f32 %v1764, 2.0
        %v1795 = vsub.f32 %v1791, %v1793
        %v1796 = vsub.f32 %v1792, %v1794
        %v1797 = vmax.f32 %v1795, 0.0
        %v1798 = vmax.f32 %v1796, 0.0
        %v1799 = vrsqrt.pop %v1797
        %v1800 = vmul.f32 %v1797, %v1799
        %vm1801 = vcmp.eq.f32.partialorder %v1797, inf
        %v1802 = vsel %vm1801, %v1797, %v1800
        %vm1803 = vcmp.eq.f32.partialorder %v1797, 0.0
        %v1804 = vand.u32 %v1797, 2147483648
        %v1805 = vsel %vm1803, %v1804, %v1802
        %v1806 = vrsqrt.pop %v1798
        %v1807 = vmul.f32 %v1798, %v1806
        %vm1808 = vcmp.eq.f32.partialorder %v1798, inf
        %v1809 = vsel %vm1808, %v1798, %v1807
        %vm1810 = vcmp.eq.f32.partialorder %v1798, 0.0
        %v1811 = vand.u32 %v1798, 2147483648
        %v1812 = vsel %vm1810, %v1811, %v1809
        %v1813 = vmul.f32 %v1805, 0.35355338
        %v1814 = vmul.f32 %v1812, 0.35355338
        %v1815 = vadd.f32 %v1813, 1e-09
        %v1816 = vadd.f32 %v1814, 1e-09
        %v1817 = vrcp.pop %v1815
        %v1818 = vmul.f32 1.0, %v1817
        %v1819 = vrcp.pop %v1816
        %v1820 = vmul.f32 1.0, %v1819
        %v1821 = vsel %vm763, %v1818, -inf
        %1822 = vmax.xlane.f32.xlu0 %v1821
        %v1823 = vpop.xlane.xlu0 %1822
        %v1824 = vsel %vm763, %v1820, -inf
        %1825 = vmax.xlane.f32.xlu0 %v1824
        %v1826 = vpop.xlane.xlu0 %1825
        %v1827 = vsub.f32 %v1818, %v1823
        %v1828 = vsub.f32 %v1820, %v1826
        %v1829 = vmul.f32 %v1827, 1.442695
        %v1830 = vpow.pop %v1829
        %v1831 = vmul.f32 %v1828, 1.442695
        %v1832 = vpow.pop %v1831
        %v1833 = vsel %vm763, %v1830, 0.0
        %1834 = vadd.xlane.f32.xlu0 %v1833
        %v1835 = vpop.xlane.xlu0 %1834
        %v1836 = vsel %vm763, %v1832, 0.0
        %1837 = vadd.xlane.f32.xlu0 %v1836
        %v1838 = vpop.xlane.xlu0 %1837
        %v1839 = vrcp.pop %v1835
        %v1840 = vmul.f32 %v1830, %v1839
        %v1841 = vrcp.pop %v1838
        %v1842 = vmul.f32 %v1832, %v1841
        %1843 = vrot.lane.b32.xlu0 %v753, 112
        %v1844 = vpop.permute.xlu0 %1843
        %v1847 = vsel %vm763, %v1840, 0
        %1849 = vmatprep.subr.mxu0 0.0
        %1850 = vmatpush1.msra.mxu0 %v1844
        %1851 = vmatprep.subr.mxu0 0.0
        %1852 = vmatpush1.msra.mxu0 0.0
        %1853 = vmatprep.subr.mxu0 0.0
        %1854 = vmatpush1.msra.mxu0 0.0
        %1855 = vmatprep.subr.mxu0 0.0
        %1856 = vmatpush1.msra.mxu0 0.0
        %1857 = vmatprep.subr.mxu0 0.0
        %1858 = vmatpush1.msra.mxu0 0.0
        %1859 = vmatprep.subr.mxu0 0.0
        %1860 = vmatpush1.msra.mxu0 0.0
        %1861 = vmatprep.subr.mxu0 0.0
        %1862 = vmatpush1.msra.mxu0 0.0
        %1863 = vmatprep.subr.mxu0 0.0
        %1864 = vmatpush1.msra.mxu0 0.0
        %1865 = vmatprep.subr.mxu0 0.0
        %1866 = vmatpush1.msra.mxu0 0.0
        %1867 = vmatprep.subr.mxu0 0.0
        %1868 = vmatpush1.msra.mxu0 0.0
        %1869 = vmatprep.subr.mxu0 0.0
        %1870 = vmatpush1.msra.mxu0 0.0
        %1871 = vmatprep.subr.mxu0 0.0
        %1872 = vmatpush1.msra.mxu0 0.0
        %1873 = vmatprep.subr.mxu0 0.0
        %1874 = vmatpush1.msra.mxu0 0.0
        %1875 = vmatprep.subr.mxu0 0.0
        %1876 = vmatpush1.msra.mxu0 0.0
        %1877 = vmatprep.subr.mxu0 0.0
        %1878 = vmatpush1.msra.mxu0 0.0
        %1879 = vmatprep.subr.mxu0 0.0
        %1880 = vmatpush1.msra.mxu0 0.0
        %1881 = vmatprep.subr.mxu0 0.0
        %1882 = vmatpush1.msra.mxu0 0.0
        %1883 = vmatprep.subr.mxu0 0.0
        %1884 = vmatpush1.msra.mxu0 0.0
        %1885 = vmatprep.subr.mxu0 0.0
        %1886 = vmatpush1.msra.mxu0 0.0
        %1887 = vmatprep.subr.mxu0 0.0
        %1888 = vmatpush1.msra.mxu0 0.0
        %1889 = vmatprep.subr.mxu0 0.0
        %1890 = vmatpush1.msra.mxu0 0.0
        %1891 = vmatprep.subr.mxu0 0.0
        %1892 = vmatpush1.msra.mxu0 0.0
        %1893 = vmatprep.subr.mxu0 0.0
        %1894 = vmatpush1.msra.mxu0 0.0
        %1895 = vmatprep.subr.mxu0 0.0
        %1896 = vmatpush1.msra.mxu0 0.0
        %1897 = vmatprep.subr.mxu0 0.0
        %1898 = vmatpush1.msra.mxu0 0.0
        %1899 = vmatprep.subr.mxu0 0.0
        %1900 = vmatpush1.msra.mxu0 0.0
        %1901 = vmatprep.subr.mxu0 0.0
        %1902 = vmatpush1.msra.mxu0 0.0
        %1903 = vmatprep.subr.mxu0 0.0
        %1904 = vmatpush1.msra.mxu0 0.0
        %1905 = vmatprep.subr.mxu0 0.0
        %1906 = vmatpush1.msra.mxu0 0.0
        %1907 = vmatprep.subr.mxu0 0.0
        %1908 = vmatpush1.msra.mxu0 0.0
        %1909 = vmatprep.subr.mxu0 0.0
        %1910 = vmatpush1.msra.mxu0 0.0
        %1911 = vmatprep.subr.mxu0 0.0
        %1912 = vmatpush1.msra.mxu0 0.0
        %1913 = vmatprep.mubr.f32.mxu0 0.0
        %1914 = vmatmul.mubr.f32.gmra.mrb[0].mxu0 %v1847
        %v1915 = vpop.f32.mrb[0].mxu0
        %v1916 = vadd.f32 0.0, %v1915
        %v1917 = vpop.f32.mrb[0].mxu0
        %1918 = vdwg.mxu0
        %1919 = vrot.lane.b32.xlu0 %v758, 112
        %v1920 = vpop.permute.xlu0 %1919
        %v1923 = vsel %vm763, %v1842, 0
        %1925 = vmatprep.subr.mxu0 0.0
        %1926 = vmatpush1.msra.mxu0 %v1920
        %1927 = vmatprep.subr.mxu0 0.0
        %1928 = vmatpush1.msra.mxu0 0.0
        %1929 = vmatprep.subr.mxu0 0.0
        %1930 = vmatpush1.msra.mxu0 0.0
        %1931 = vmatprep.subr.mxu0 0.0
        %1932 = vmatpush1.msra.mxu0 0.0
        %1933 = vmatprep.subr.mxu0 0.0
        %1934 = vmatpush1.msra.mxu0 0.0
        %1935 = vmatprep.subr.mxu0 0.0
        %1936 = vmatpush1.msra.mxu0 0.0
        %1937 = vmatprep.subr.mxu0 0.0
        %1938 = vmatpush1.msra.mxu0 0.0
        %1939 = vmatprep.subr.mxu0 0.0
        %1940 = vmatpush1.msra.mxu0 0.0
        %1941 = vmatprep.subr.mxu0 0.0
        %1942 = vmatpush1.msra.mxu0 0.0
        %1943 = vmatprep.subr.mxu0 0.0
        %1944 = vmatpush1.msra.mxu0 0.0
        %1945 = vmatprep.subr.mxu0 0.0
        %1946 = vmatpush1.msra.mxu0 0.0
        %1947 = vmatprep.subr.mxu0 0.0
        %1948 = vmatpush1.msra.mxu0 0.0
        %1949 = vmatprep.subr.mxu0 0.0
        %1950 = vmatpush1.msra.mxu0 0.0
        %1951 = vmatprep.subr.mxu0 0.0
        %1952 = vmatpush1.msra.mxu0 0.0
        %1953 = vmatprep.subr.mxu0 0.0
        %1954 = vmatpush1.msra.mxu0 0.0
        %1955 = vmatprep.subr.mxu0 0.0
        %1956 = vmatpush1.msra.mxu0 0.0
        %1957 = vmatprep.subr.mxu0 0.0
        %1958 = vmatpush1.msra.mxu0 0.0
        %1959 = vmatprep.subr.mxu0 0.0
        %1960 = vmatpush1.msra.mxu0 0.0
        %1961 = vmatprep.subr.mxu0 0.0
        %1962 = vmatpush1.msra.mxu0 0.0
        %1963 = vmatprep.subr.mxu0 0.0
        %1964 = vmatpush1.msra.mxu0 0.0
        %1965 = vmatprep.subr.mxu0 0.0
        %1966 = vmatpush1.msra.mxu0 0.0
        %1967 = vmatprep.subr.mxu0 0.0
        %1968 = vmatpush1.msra.mxu0 0.0
        %1969 = vmatprep.subr.mxu0 0.0
        %1970 = vmatpush1.msra.mxu0 0.0
        %1971 = vmatprep.subr.mxu0 0.0
        %1972 = vmatpush1.msra.mxu0 0.0
        %1973 = vmatprep.subr.mxu0 0.0
        %1974 = vmatpush1.msra.mxu0 0.0
        %1975 = vmatprep.subr.mxu0 0.0
        %1976 = vmatpush1.msra.mxu0 0.0
        %1977 = vmatprep.subr.mxu0 0.0
        %1978 = vmatpush1.msra.mxu0 0.0
        %1979 = vmatprep.subr.mxu0 0.0
        %1980 = vmatpush1.msra.mxu0 0.0
        %1981 = vmatprep.subr.mxu0 0.0
        %1982 = vmatpush1.msra.mxu0 0.0
        %1983 = vmatprep.subr.mxu0 0.0
        %1984 = vmatpush1.msra.mxu0 0.0
        %1985 = vmatprep.subr.mxu0 0.0
        %1986 = vmatpush1.msra.mxu0 0.0
        %1987 = vmatprep.subr.mxu0 0.0
        %1988 = vmatpush1.msra.mxu0 0.0
        %1989 = vmatprep.mubr.f32.mxu0 0.0
        %1990 = vmatmul.mubr.f32.gmra.mrb[0].mxu0 %v1923
        %v1991 = vpop.f32.mrb[0].mxu0
        %v1992 = vadd.f32 0.0, %v1991
        %v1993 = vpop.f32.mrb[0].mxu0
        %1994 = vdwg.mxu0
        %1997 = vrot.lane.b32.xlu0 %v1916, 16
        %v1998 = vpop.permute.xlu0 %1997
        %1999 = vrot.lane.b32.xlu0 %v1992, 16
        %v2000 = vpop.permute.xlu0 %1999
        %vm2003 = vcmask 195712
        %2004 = vst.msk [vmem:[#allocation2] sm:$0xff] %vm2003, %v1998
        %2005 = vst.msk [vmem:[#allocation2 + $0x8] sm:$0xff] %vm2003, %v2000
        %2006 = vrot.lane.b32.xlu0 %v761, 104
        %v2007 = vpop.permute.xlu0 %2006
        %2008 = vrot.lane.b32.xlu0 %v762, 104
        %v2009 = vpop.permute.xlu0 %2008
        %v2012 = vsel %vm763, %v2007, 0.0
        %2013 = vadd.xlane.f32.xlu0 %v2012
        %v2014 = vpop.xlane.xlu0 %2013
        %v2015 = vsel %vm763, %v2009, 0.0
        %2016 = vadd.xlane.f32.xlu0 %v2015
        %v2017 = vpop.xlane.xlu0 %2016
        %2018 = vrot.lane.b32.xlu0 %v770, 104
        %v2019 = vpop.permute.xlu0 %2018
        %2020 = vrot.lane.b32.xlu0 %v771, 104
        %v2021 = vpop.permute.xlu0 %2020
        %v2024 = vsel %vm763, %v2019, 0.0
        %2025 = vadd.xlane.f32.xlu0 %v2024
        %v2026 = vpop.xlane.xlu0 %2025
        %v2027 = vsel %vm763, %v2021, 0.0
        %2028 = vadd.xlane.f32.xlu0 %v2027
        %v2029 = vpop.xlane.xlu0 %2028
        %2030 = vrot.lane.b32.xlu0 %v559, 104
        %v2031 = vpop.permute.xlu0 %2030
        %2032 = vrot.lane.b32.xlu0 %v656, 104
        %v2033 = vpop.permute.xlu0 %2032
        %v2034 = vsel %vm763, %v2031, 0
        %v2036 = vsel %vm763, %v2033, 0
        %2038 = vmatprep.subr.mxu0 0.0
        %2039 = vmatpush1.xpose.msra.mxu0 %v2036
        %2040 = vmatprep.subr.mxu0 0.0
        %2041 = vmatpush1.xpose.msra.mxu0 0.0
        %2042 = vmatprep.subr.mxu0 0.0
        %2043 = vmatpush1.xpose.msra.mxu0 0.0
        %2044 = vmatprep.subr.mxu0 0.0
        %2045 = vmatpush1.xpose.msra.mxu0 0.0
        %2046 = vmatprep.subr.mxu0 0.0
        %2047 = vmatpush1.xpose.msra.mxu0 0.0
        %2048 = vmatprep.subr.mxu0 0.0
        %2049 = vmatpush1.xpose.msra.mxu0 0.0
        %2050 = vmatprep.subr.mxu0 0.0
        %2051 = vmatpush1.xpose.msra.mxu0 0.0
        %2052 = vmatprep.subr.mxu0 0.0
        %2053 = vmatpush1.xpose.msra.mxu0 0.0
        %2054 = vmatprep.subr.mxu0 0.0
        %2055 = vmatpush1.xpose.msra.mxu0 0.0
        %2056 = vmatprep.subr.mxu0 0.0
        %2057 = vmatpush1.xpose.msra.mxu0 0.0
        %2058 = vmatprep.subr.mxu0 0.0
        %2059 = vmatpush1.xpose.msra.mxu0 0.0
        %2060 = vmatprep.subr.mxu0 0.0
        %2061 = vmatpush1.xpose.msra.mxu0 0.0
        %2062 = vmatprep.subr.mxu0 0.0
        %2063 = vmatpush1.xpose.msra.mxu0 0.0
        %2064 = vmatprep.subr.mxu0 0.0
        %2065 = vmatpush1.xpose.msra.mxu0 0.0
        %2066 = vmatprep.subr.mxu0 0.0
        %2067 = vmatpush1.xpose.msra.mxu0 0.0
        %2068 = vmatprep.subr.mxu0 0.0
        %2069 = vmatpush1.xpose.msra.mxu0 0.0
        %2070 = vmatprep.subr.mxu0 0.0
        %2071 = vmatpush1.xpose.msra.mxu0 0.0
        %2072 = vmatprep.subr.mxu0 0.0
        %2073 = vmatpush1.xpose.msra.mxu0 0.0
        %2074 = vmatprep.subr.mxu0 0.0
        %2075 = vmatpush1.xpose.msra.mxu0 0.0
        %2076 = vmatprep.subr.mxu0 0.0
        %2077 = vmatpush1.xpose.msra.mxu0 0.0
        %2078 = vmatprep.subr.mxu0 0.0
        %2079 = vmatpush1.xpose.msra.mxu0 0.0
        %2080 = vmatprep.subr.mxu0 0.0
        %2081 = vmatpush1.xpose.msra.mxu0 0.0
        %2082 = vmatprep.subr.mxu0 0.0
        %2083 = vmatpush1.xpose.msra.mxu0 0.0
        %2084 = vmatprep.subr.mxu0 0.0
        %2085 = vmatpush1.xpose.msra.mxu0 0.0
        %2086 = vmatprep.subr.mxu0 0.0
        %2087 = vmatpush1.xpose.msra.mxu0 0.0
        %2088 = vmatprep.subr.mxu0 0.0
        %2089 = vmatpush1.xpose.msra.mxu0 0.0
        %2090 = vmatprep.subr.mxu0 0.0
        %2091 = vmatpush1.xpose.msra.mxu0 0.0
        %2092 = vmatprep.subr.mxu0 0.0
        %2093 = vmatpush1.xpose.msra.mxu0 0.0
        %2094 = vmatprep.subr.mxu0 0.0
        %2095 = vmatpush1.xpose.msra.mxu0 0.0
        %2096 = vmatprep.subr.mxu0 0.0
        %2097 = vmatpush1.xpose.msra.mxu0 0.0
        %2098 = vmatprep.subr.mxu0 0.0
        %2099 = vmatpush1.xpose.msra.mxu0 0.0
        %2100 = vmatprep.subr.mxu0 0.0
        %2101 = vmatpush1.xpose.msra.mxu0 0.0
        %2102 = vmatprep.mubr.f32.mxu0 0.0
        %2103 = vmatmul.mubr.f32.gmra.mrb[0].mxu0 %v2034
        %v2104 = vpop.f32.mrb[0].mxu0
        %v2105 = vadd.f32 0.0, %v2104
        %v2106 = vpop.f32.mrb[0].mxu0
        %2107 = vdwg.mxu0
        %2108 = vrot.lane.b32.xlu0 %v564, 104
        %v2109 = vpop.permute.xlu0 %2108
        %2110 = vrot.lane.b32.xlu0 %v661, 104
        %v2111 = vpop.permute.xlu0 %2110
        %v2112 = vsel %vm763, %v2109, 0
        %v2114 = vsel %vm763, %v2111, 0
        %2116 = vmatprep.subr.mxu0 0.0
        %2117 = vmatpush1.xpose.msra.mxu0 %v2114
        %2118 = vmatprep.subr.mxu0 0.0
        %2119 = vmatpush1.xpose.msra.mxu0 0.0
        %2120 = vmatprep.subr.mxu0 0.0
        %2121 = vmatpush1.xpose.msra.mxu0 0.0
        %2122 = vmatprep.subr.mxu0 0.0
        %2123 = vmatpush1.xpose.msra.mxu0 0.0
        %2124 = vmatprep.subr.mxu0 0.0
        %2125 = vmatpush1.xpose.msra.mxu0 0.0
        %2126 = vmatprep.subr.mxu0 0.0
        %2127 = vmatpush1.xpose.msra.mxu0 0.0
        %2128 = vmatprep.subr.mxu0 0.0
        %2129 = vmatpush1.xpose.msra.mxu0 0.0
        %2130 = vmatprep.subr.mxu0 0.0
        %2131 = vmatpush1.xpose.msra.mxu0 0.0
        %2132 = vmatprep.subr.mxu0 0.0
        %2133 = vmatpush1.xpose.msra.mxu0 0.0
        %2134 = vmatprep.subr.mxu0 0.0
        %2135 = vmatpush1.xpose.msra.mxu0 0.0
        %2136 = vmatprep.subr.mxu0 0.0
        %2137 = vmatpush1.xpose.msra.mxu0 0.0
        %2138 = vmatprep.subr.mxu0 0.0
        %2139 = vmatpush1.xpose.msra.mxu0 0.0
        %2140 = vmatprep.subr.mxu0 0.0
        %2141 = vmatpush1.xpose.msra.mxu0 0.0
        %2142 = vmatprep.subr.mxu0 0.0
        %2143 = vmatpush1.xpose.msra.mxu0 0.0
        %2144 = vmatprep.subr.mxu0 0.0
        %2145 = vmatpush1.xpose.msra.mxu0 0.0
        %2146 = vmatprep.subr.mxu0 0.0
        %2147 = vmatpush1.xpose.msra.mxu0 0.0
        %2148 = vmatprep.subr.mxu0 0.0
        %2149 = vmatpush1.xpose.msra.mxu0 0.0
        %2150 = vmatprep.subr.mxu0 0.0
        %2151 = vmatpush1.xpose.msra.mxu0 0.0
        %2152 = vmatprep.subr.mxu0 0.0
        %2153 = vmatpush1.xpose.msra.mxu0 0.0
        %2154 = vmatprep.subr.mxu0 0.0
        %2155 = vmatpush1.xpose.msra.mxu0 0.0
        %2156 = vmatprep.subr.mxu0 0.0
        %2157 = vmatpush1.xpose.msra.mxu0 0.0
        %2158 = vmatprep.subr.mxu0 0.0
        %2159 = vmatpush1.xpose.msra.mxu0 0.0
        %2160 = vmatprep.subr.mxu0 0.0
        %2161 = vmatpush1.xpose.msra.mxu0 0.0
        %2162 = vmatprep.subr.mxu0 0.0
        %2163 = vmatpush1.xpose.msra.mxu0 0.0
        %2164 = vmatprep.subr.mxu0 0.0
        %2165 = vmatpush1.xpose.msra.mxu0 0.0
        %2166 = vmatprep.subr.mxu0 0.0
        %2167 = vmatpush1.xpose.msra.mxu0 0.0
        %2168 = vmatprep.subr.mxu0 0.0
        %2169 = vmatpush1.xpose.msra.mxu0 0.0
        %2170 = vmatprep.subr.mxu0 0.0
        %2171 = vmatpush1.xpose.msra.mxu0 0.0
        %2172 = vmatprep.subr.mxu0 0.0
        %2173 = vmatpush1.xpose.msra.mxu0 0.0
        %2174 = vmatprep.subr.mxu0 0.0
        %2175 = vmatpush1.xpose.msra.mxu0 0.0
        %2176 = vmatprep.subr.mxu0 0.0
        %2177 = vmatpush1.xpose.msra.mxu0 0.0
        %2178 = vmatprep.subr.mxu0 0.0
        %2179 = vmatpush1.xpose.msra.mxu0 0.0
        %2180 = vmatprep.mubr.f32.mxu0 0.0
        %2181 = vmatmul.mubr.f32.gmra.mrb[0].mxu0 %v2112
        %v2182 = vpop.f32.mrb[0].mxu0
        %v2183 = vadd.f32 0.0, %v2182
        %v2184 = vpop.f32.mrb[0].mxu0
        %2185 = vdwg.mxu0
        %v2188 = vlaneseq
        %v2189 = vshrl.u32 %v2188, 7
        %v2190 = vsub.s32 %v933, %v2189
        %v2191 = vrot.slane %v2026, %v2190
        %v2192 = vlaneseq
        %v2193 = vshrl.u32 %v2192, 7
        %v2194 = vsub.s32 %v933, %v2193
        %v2195 = vrot.slane %v2029, %v2194
        %v2196 = vsel %vm942, %v2191, %v2191
        %v2197 = vsel %vm944, %v2191, %v2196
        %v2198 = vsel %vm946, %v2191, %v2197
        %v2199 = vsel %vm948, %v2191, %v2198
        %v2200 = vsel %vm950, %v2191, %v2199
        %v2201 = vsel %vm952, %v2191, %v2200
        %v2202 = vsel %vm942, %v2195, %v2195
        %v2203 = vsel %vm944, %v2195, %v2202
        %v2204 = vsel %vm946, %v2195, %v2203
        %v2205 = vsel %vm948, %v2195, %v2204
        %v2206 = vsel %vm950, %v2195, %v2205
        %v2207 = vsel %vm952, %v2195, %v2206
        %v2210 = vadd.f32 %v2014, %v2201
        %v2211 = vadd.f32 %v2017, %v2207
        %v2212 = vmul.f32 %v2105, 2.0
        %v2213 = vmul.f32 %v2183, 2.0
        %v2214 = vsub.f32 %v2210, %v2212
        %v2215 = vsub.f32 %v2211, %v2213
        %v2216 = vmax.f32 %v2214, 0.0
        %v2217 = vmax.f32 %v2215, 0.0
        %v2218 = vrsqrt.pop %v2216
        %v2219 = vmul.f32 %v2216, %v2218
        %vm2220 = vcmp.eq.f32.partialorder %v2216, inf
        %v2221 = vsel %vm2220, %v2216, %v2219
        %vm2222 = vcmp.eq.f32.partialorder %v2216, 0.0
        %v2223 = vand.u32 %v2216, 2147483648
        %v2224 = vsel %vm2222, %v2223, %v2221
        %v2225 = vrsqrt.pop %v2217
        %v2226 = vmul.f32 %v2217, %v2225
        %vm2227 = vcmp.eq.f32.partialorder %v2217, inf
        %v2228 = vsel %vm2227, %v2217, %v2226
        %vm2229 = vcmp.eq.f32.partialorder %v2217, 0.0
        %v2230 = vand.u32 %v2217, 2147483648
        %v2231 = vsel %vm2229, %v2230, %v2228
        %v2232 = vmul.f32 %v2224, 0.35355338
        %v2233 = vmul.f32 %v2231, 0.35355338
        %v2234 = vadd.f32 %v2232, 1e-09
        %v2235 = vadd.f32 %v2233, 1e-09
        %v2236 = vrcp.pop %v2234
        %v2237 = vmul.f32 1.0, %v2236
        %v2238 = vrcp.pop %v2235
        %v2239 = vmul.f32 1.0, %v2238
        %v2240 = vsel %vm763, %v2237, -inf
        %2241 = vmax.xlane.f32.xlu0 %v2240
        %v2242 = vpop.xlane.xlu0 %2241
        %v2243 = vsel %vm763, %v2239, -inf
        %2244 = vmax.xlane.f32.xlu0 %v2243
        %v2245 = vpop.xlane.xlu0 %2244
        %v2246 = vsub.f32 %v2237, %v2242
        %v2247 = vsub.f32 %v2239, %v2245
        %v2248 = vmul.f32 %v2246, 1.442695
        %v2249 = vpow.pop %v2248
        %v2250 = vmul.f32 %v2247, 1.442695
        %v2251 = vpow.pop %v2250
        %v2252 = vsel %vm763, %v2249, 0.0
        %2253 = vadd.xlane.f32.xlu0 %v2252
        %v2254 = vpop.xlane.xlu0 %2253
        %v2255 = vsel %vm763, %v2251, 0.0
        %2256 = vadd.xlane.f32.xlu0 %v2255
        %v2257 = vpop.xlane.xlu0 %2256
        %v2258 = vrcp.pop %v2254
        %v2259 = vmul.f32 %v2249, %v2258
        %v2260 = vrcp.pop %v2257
        %v2261 = vmul.f32 %v2251, %v2260
        %2262 = vrot.lane.b32.xlu0 %v753, 104
        %v2263 = vpop.permute.xlu0 %2262
        %v2266 = vsel %vm763, %v2259, 0
        %2268 = vmatprep.subr.mxu0 0.0
        %2269 = vmatpush1.msra.mxu0 %v2263
        %2270 = vmatprep.subr.mxu0 0.0
        %2271 = vmatpush1.msra.mxu0 0.0
        %2272 = vmatprep.subr.mxu0 0.0
        %2273 = vmatpush1.msra.mxu0 0.0
        %2274 = vmatprep.subr.mxu0 0.0
        %2275 = vmatpush1.msra.mxu0 0.0
        %2276 = vmatprep.subr.mxu0 0.0
        %2277 = vmatpush1.msra.mxu0 0.0
        %2278 = vmatprep.subr.mxu0 0.0
        %2279 = vmatpush1.msra.mxu0 0.0
        %2280 = vmatprep.subr.mxu0 0.0
        %2281 = vmatpush1.msra.mxu0 0.0
        %2282 = vmatprep.subr.mxu0 0.0
        %2283 = vmatpush1.msra.mxu0 0.0
        %2284 = vmatprep.subr.mxu0 0.0
        %2285 = vmatpush1.msra.mxu0 0.0
        %2286 = vmatprep.subr.mxu0 0.0
        %2287 = vmatpush1.msra.mxu0 0.0
        %2288 = vmatprep.subr.mxu0 0.0
        %2289 = vmatpush1.msra.mxu0 0.0
        %2290 = vmatprep.subr.mxu0 0.0
        %2291 = vmatpush1.msra.mxu0 0.0
        %2292 = vmatprep.subr.mxu0 0.0
        %2293 = vmatpush1.msra.mxu0 0.0
        %2294 = vmatprep.subr.mxu0 0.0
        %2295 = vmatpush1.msra.mxu0 0.0
        %2296 = vmatprep.subr.mxu0 0.0
        %2297 = vmatpush1.msra.mxu0 0.0
        %2298 = vmatprep.subr.mxu0 0.0
        %2299 = vmatpush1.msra.mxu0 0.0
        %2300 = vmatprep.subr.mxu0 0.0
        %2301 = vmatpush1.msra.mxu0 0.0
        %2302 = vmatprep.subr.mxu0 0.0
        %2303 = vmatpush1.msra.mxu0 0.0
        %2304 = vmatprep.subr.mxu0 0.0
        %2305 = vmatpush1.msra.mxu0 0.0
        %2306 = vmatprep.subr.mxu0 0.0
        %2307 = vmatpush1.msra.mxu0 0.0
        %2308 = vmatprep.subr.mxu0 0.0
        %2309 = vmatpush1.msra.mxu0 0.0
        %2310 = vmatprep.subr.mxu0 0.0
        %2311 = vmatpush1.msra.mxu0 0.0
        %2312 = vmatprep.subr.mxu0 0.0
        %2313 = vmatpush1.msra.mxu0 0.0
        %2314 = vmatprep.subr.mxu0 0.0
        %2315 = vmatpush1.msra.mxu0 0.0
        %2316 = vmatprep.subr.mxu0 0.0
        %2317 = vmatpush1.msra.mxu0 0.0
        %2318 = vmatprep.subr.mxu0 0.0
        %2319 = vmatpush1.msra.mxu0 0.0
        %2320 = vmatprep.subr.mxu0 0.0
        %2321 = vmatpush1.msra.mxu0 0.0
        %2322 = vmatprep.subr.mxu0 0.0
        %2323 = vmatpush1.msra.mxu0 0.0
        %2324 = vmatprep.subr.mxu0 0.0
        %2325 = vmatpush1.msra.mxu0 0.0
        %2326 = vmatprep.subr.mxu0 0.0
        %2327 = vmatpush1.msra.mxu0 0.0
        %2328 = vmatprep.subr.mxu0 0.0
        %2329 = vmatpush1.msra.mxu0 0.0
        %2330 = vmatprep.subr.mxu0 0.0
        %2331 = vmatpush1.msra.mxu0 0.0
        %2332 = vmatprep.mubr.f32.mxu0 0.0
        %2333 = vmatmul.mubr.f32.gmra.mrb[0].mxu0 %v2266
        %v2334 = vpop.f32.mrb[0].mxu0
        %v2335 = vadd.f32 0.0, %v2334
        %v2336 = vpop.f32.mrb[0].mxu0
        %2337 = vdwg.mxu0
        %2338 = vrot.lane.b32.xlu0 %v758, 104
        %v2339 = vpop.permute.xlu0 %2338
        %v2342 = vsel %vm763, %v2261, 0
        %2344 = vmatprep.subr.mxu0 0.0
        %2345 = vmatpush1.msra.mxu0 %v2339
        %2346 = vmatprep.subr.mxu0 0.0
        %2347 = vmatpush1.msra.mxu0 0.0
        %2348 = vmatprep.subr.mxu0 0.0
        %2349 = vmatpush1.msra.mxu0 0.0
        %2350 = vmatprep.subr.mxu0 0.0
        %2351 = vmatpush1.msra.mxu0 0.0
        %2352 = vmatprep.subr.mxu0 0.0
        %2353 = vmatpush1.msra.mxu0 0.0
        %2354 = vmatprep.subr.mxu0 0.0
        %2355 = vmatpush1.msra.mxu0 0.0
        %2356 = vmatprep.subr.mxu0 0.0
        %2357 = vmatpush1.msra.mxu0 0.0
        %2358 = vmatprep.subr.mxu0 0.0
        %2359 = vmatpush1.msra.mxu0 0.0
        %2360 = vmatprep.subr.mxu0 0.0
        %2361 = vmatpush1.msra.mxu0 0.0
        %2362 = vmatprep.subr.mxu0 0.0
        %2363 = vmatpush1.msra.mxu0 0.0
        %2364 = vmatprep.subr.mxu0 0.0
        %2365 = vmatpush1.msra.mxu0 0.0
        %2366 = vmatprep.subr.mxu0 0.0
        %2367 = vmatpush1.msra.mxu0 0.0
        %2368 = vmatprep.subr.mxu0 0.0
        %2369 = vmatpush1.msra.mxu0 0.0
        %2370 = vmatprep.subr.mxu0 0.0
        %2371 = vmatpush1.msra.mxu0 0.0
        %2372 = vmatprep.subr.mxu0 0.0
        %2373 = vmatpush1.msra.mxu0 0.0
        %2374 = vmatprep.subr.mxu0 0.0
        %2375 = vmatpush1.msra.mxu0 0.0
        %2376 = vmatprep.subr.mxu0 0.0
        %2377 = vmatpush1.msra.mxu0 0.0
        %2378 = vmatprep.subr.mxu0 0.0
        %2379 = vmatpush1.msra.mxu0 0.0
        %2380 = vmatprep.subr.mxu0 0.0
        %2381 = vmatpush1.msra.mxu0 0.0
        %2382 = vmatprep.subr.mxu0 0.0
        %2383 = vmatpush1.msra.mxu0 0.0
        %2384 = vmatprep.subr.mxu0 0.0
        %2385 = vmatpush1.msra.mxu0 0.0
        %2386 = vmatprep.subr.mxu0 0.0
        %2387 = vmatpush1.msra.mxu0 0.0
        %2388 = vmatprep.subr.mxu0 0.0
        %2389 = vmatpush1.msra.mxu0 0.0
        %2390 = vmatprep.subr.mxu0 0.0
        %2391 = vmatpush1.msra.mxu0 0.0
        %2392 = vmatprep.subr.mxu0 0.0
        %2393 = vmatpush1.msra.mxu0 0.0
        %2394 = vmatprep.subr.mxu0 0.0
        %2395 = vmatpush1.msra.mxu0 0.0
        %2396 = vmatprep.subr.mxu0 0.0
        %2397 = vmatpush1.msra.mxu0 0.0
        %2398 = vmatprep.subr.mxu0 0.0
        %2399 = vmatpush1.msra.mxu0 0.0
        %2400 = vmatprep.subr.mxu0 0.0
        %2401 = vmatpush1.msra.mxu0 0.0
        %2402 = vmatprep.subr.mxu0 0.0
        %2403 = vmatpush1.msra.mxu0 0.0
        %2404 = vmatprep.subr.mxu0 0.0
        %2405 = vmatpush1.msra.mxu0 0.0
        %2406 = vmatprep.subr.mxu0 0.0
        %2407 = vmatpush1.msra.mxu0 0.0
        %2408 = vmatprep.mubr.f32.mxu0 0.0
        %2409 = vmatmul.mubr.f32.gmra.mrb[0].mxu0 %v2342
        %v2410 = vpop.f32.mrb[0].mxu0
        %v2411 = vadd.f32 0.0, %v2410
        %v2412 = vpop.f32.mrb[0].mxu0
        %2413 = vdwg.mxu0
        %2416 = vrot.lane.b32.xlu0 %v2335, 24
        %v2417 = vpop.permute.xlu0 %2416
        %2418 = vrot.lane.b32.xlu0 %v2411, 24
        %v2419 = vpop.permute.xlu0 %2418
        %vm2422 = vcmask 261312
        %2423 = vst.msk [vmem:[#allocation2] sm:$0xff] %vm2422, %v2417
        %2424 = vst.msk [vmem:[#allocation2 + $0x8] sm:$0xff] %vm2422, %v2419
        %v2425 = vld [vmem:[#allocation2] sm:$0xff]
        %v2426 = vld [vmem:[#allocation2 + $0x8] sm:$0xff]
        %v2427 = vld [vmem:[#allocation14] sm:$0xff]
        %v2428 = vld [vmem:[#allocation14 + $0x8] sm:$0xff]
        %v2429 = vld [vmem:[#allocation14 + $0x10] sm:$0xff]
        %v2430 = vld [vmem:[#allocation14 + $0x18] sm:$0xff]
        %v2431 = vld [vmem:[%s7] sm:$0x1]
        %v2433 = vlaneseq
        %v2434 = vshrl.u32 %v2433, 7
        %v2435 = vsub.s32 0, %v2434
        %v2436 = vrot.slane %v2431, %v2435
        %v2439 = vsel %vm473, %v2425, 0
        %v2442 = vsel %vm473, %v2426, 0
        %v2445 = vsel %vm473, %v2427, 0
        %v2448 = vsel %vm473, %v2428, 0
        %v2451 = vsel %vm473, %v2429, 0
        %v2454 = vsel %vm473, %v2430, 0
        %2456 = vmatprep.subr.mxu0 0.0
        %2457 = vmatpush1.xpose.msra.mxu0 %v2445
        %2458 = vmatprep.subr.mxu0 0.0
        %2459 = vmatpush1.xpose.msra.mxu0 %v2448
        %2460 = vmatprep.subr.mxu0 0.0
        %2461 = vmatpush1.xpose.msra.mxu0 %v2451
        %2462 = vmatprep.subr.mxu0 0.0
        %2463 = vmatpush1.xpose.msra.mxu0 %v2454
        %2464 = vmatprep.subr.mxu0 0.0
        %2465 = vmatpush1.xpose.msra.mxu0 0.0
        %2466 = vmatprep.subr.mxu0 0.0
        %2467 = vmatpush1.xpose.msra.mxu0 0.0
        %2468 = vmatprep.subr.mxu0 0.0
        %2469 = vmatpush1.xpose.msra.mxu0 0.0
        %2470 = vmatprep.subr.mxu0 0.0
        %2471 = vmatpush1.xpose.msra.mxu0 0.0
        %2472 = vmatprep.subr.mxu0 0.0
        %2473 = vmatpush1.xpose.msra.mxu0 0.0
        %2474 = vmatprep.subr.mxu0 0.0
        %2475 = vmatpush1.xpose.msra.mxu0 0.0
        %2476 = vmatprep.subr.mxu0 0.0
        %2477 = vmatpush1.xpose.msra.mxu0 0.0
        %2478 = vmatprep.subr.mxu0 0.0
        %2479 = vmatpush1.xpose.msra.mxu0 0.0
        %2480 = vmatprep.subr.mxu0 0.0
        %2481 = vmatpush1.xpose.msra.mxu0 0.0
        %2482 = vmatprep.subr.mxu0 0.0
        %2483 = vmatpush1.xpose.msra.mxu0 0.0
        %2484 = vmatprep.subr.mxu0 0.0
        %2485 = vmatpush1.xpose.msra.mxu0 0.0
        %2486 = vmatprep.subr.mxu0 0.0
        %2487 = vmatpush1.xpose.msra.mxu0 0.0
        %2488 = vmatprep.subr.mxu0 0.0
        %2489 = vmatpush1.xpose.msra.mxu0 0.0
        %2490 = vmatprep.subr.mxu0 0.0
        %2491 = vmatpush1.xpose.msra.mxu0 0.0
        %2492 = vmatprep.subr.mxu0 0.0
        %2493 = vmatpush1.xpose.msra.mxu0 0.0
        %2494 = vmatprep.subr.mxu0 0.0
        %2495 = vmatpush1.xpose.msra.mxu0 0.0
        %2496 = vmatprep.subr.mxu0 0.0
        %2497 = vmatpush1.xpose.msra.mxu0 0.0
        %2498 = vmatprep.subr.mxu0 0.0
        %2499 = vmatpush1.xpose.msra.mxu0 0.0
        %2500 = vmatprep.subr.mxu0 0.0
        %2501 = vmatpush1.xpose.msra.mxu0 0.0
        %2502 = vmatprep.subr.mxu0 0.0
        %2503 = vmatpush1.xpose.msra.mxu0 0.0
        %2504 = vmatprep.subr.mxu0 0.0
        %2505 = vmatpush1.xpose.msra.mxu0 0.0
        %2506 = vmatprep.subr.mxu0 0.0
        %2507 = vmatpush1.xpose.msra.mxu0 0.0
        %2508 = vmatprep.subr.mxu0 0.0
        %2509 = vmatpush1.xpose.msra.mxu0 0.0
        %2510 = vmatprep.subr.mxu0 0.0
        %2511 = vmatpush1.xpose.msra.mxu0 0.0
        %2512 = vmatprep.subr.mxu0 0.0
        %2513 = vmatpush1.xpose.msra.mxu0 0.0
        %2514 = vmatprep.subr.mxu0 0.0
        %2515 = vmatpush1.xpose.msra.mxu0 0.0
        %2516 = vmatprep.subr.mxu0 0.0
        %2517 = vmatpush1.xpose.msra.mxu0 0.0
        %2518 = vmatprep.subr.mxu0 0.0
        %2519 = vmatpush1.xpose.msra.mxu0 0.0
        %2520 = vmatprep.mubr.f32.mxu0 0.0
        %2521 = vmatmul.mubr.f32.gmra.mrb[0].mxu0 %v2439
        %v2522 = vpop.f32.mrb[0].mxu0
        %v2523 = vadd.f32 %v2436, %v2522
        %v2524 = vpop.f32.mrb[0].mxu0
        %2525 = vmatprep.mubr.f32.mxu0 0.0
        %2526 = vmatmul.mubr.f32.gmra.mrb[0].mxu0 %v2442
        %v2527 = vpop.f32.mrb[0].mxu0
        %v2528 = vadd.f32 %v2436, %v2527
        %v2529 = vpop.f32.mrb[0].mxu0
        %2530 = vdwg.mxu0
        %2531 = vst.msk [vmem:[%s458] sm:$0xff] %vm473, %v2523
        %2532 = vst.msk [vmem:[%s458 + $0x8] sm:$0xff] %vm473, %v2528
        %s2533 = sand.u32 %s221, 1
        %s2534 = scalar_lea.sflag [#allocation5], %s2533
        %s2535 = sand.u32 %s221, 1
        %s2536 = smul.addr %s2535, 16
        %s2537 = scalar_lea.vmem [#allocation15], %s2536
        // Predicated region
        $region81: #{tpu_custom_call.1} parent=51 // pred_check
          %p2538 = pneg %p231
        $region82: #{tpu_custom_call.1} parent=51 // pred_check_branch
          %2540 = sbr.rel (%p2538) target = $region84
        $region83: #{tpu_custom_call.1} parent=51 // pred_region
          %s2541 = smul.u32 2, %s30
          %s2543 = ssub.s32 256, 256
          %2544 = vsyncadd %s2534, %s2543
          %s2545 = smul.addr %s2541, 128
          %s2546 = scalar_lea.hbm %s8, %s2545
          %s2547 = sshll.u32 %s2537, 4
          %s2548 = int_to_ptr.vmem [resolvable:$true] %s2547
          %2553 = dma.vmem_to_hbm [thread:$0]  %s2548, 256, %s2546, %s2534, 128, 128, 8
        $region84: #{tpu_custom_call.1} parent=51 // pred_fallthru
          _
      $region52: #{tpu_custom_call.1} parent=5 // pred_fallthru
        _
      %p2554 = scmp.le.s32.totalorder 2, %s25
      // Predicated region
      $region85: #{tpu_custom_call.1} parent=5 // pred_check
        %p2555 = pneg %p2554
      $region86: #{tpu_custom_call.1} parent=5 // pred_check_branch
        %2557 = sbr.rel (%p2555) target = $region88
      $region87: #{tpu_custom_call.1} parent=5 // pred_region
        %s2558 = ssub.s32 %s25, 2
        // Predicated region
        $region89: #{tpu_custom_call.1} parent=87 // pred_check
          %p2559 = pneg %p237
        $region90: #{tpu_custom_call.1} parent=87 // pred_check_branch
          %2561 = sbr.rel (%p2559) target = $region92
        $region91: #{tpu_custom_call.1} parent=87 // pred_region
          %s2562 = sand.u32 %s222, 1
          %s2563 = scalar_lea.sflag [#allocation5], %s2562
          %s2564 = sand.u32 %s222, 1
          %s2565 = smul.addr %s2564, 16
          %s2566 = scalar_lea.vmem [#allocation15], %s2565
          %2567 = dma.done %s2563, 256
        $region92: #{tpu_custom_call.1} parent=87 // pred_fallthru
          _
      $region88: #{tpu_custom_call.1} parent=5 // pred_fallthru
        _
    $region6: #{tpu_custom_call.1} parent=1 // loop_footer
      %s29 = sadd.s32 1, %s25
    $region7: #{tpu_custom_call.1} parent=1 // loop_footer_branch
      %24 = sbr.rel target = $region3
    $region8: #{tpu_custom_call.1} parent=1 // loop_exit
      _
    %2568 = vsyncpa [#allocation4], 1
    %s2569 = scalar_lea.sflag [#allocation4], 1
    %2570 = vsyncpa %s2569, 1
    %2571 = vsyncpa [#allocation7], 1
    %s2572 = scalar_lea.sflag [#allocation7], 1
    %2573 = vsyncpa %s2572, 1
    %2574 = vsyncpa [#allocation10], 1
    %2575 = vsyncpa [#allocation13], 1
    %2576 = vsyncpa [#allocation5], 1
    %s2577 = scalar_lea.sflag [#allocation5], 1
    %2578 = vsyncpa %s2577, 1

</llo_original>
